<compile_context>
chip_gen: v7x
topology: tpu7x:2x2x1
jax: 0.10.0
libtpu: 0.0.40
codegen_flags: <defaults>
</compile_context>

<pallas_src>
import functools

import numpy as np
import jax
import jax.numpy as jnp
from jax.experimental import pallas as pl
from jax.experimental.pallas import tpu as pltpu


# --------------------------- Fused wavefront LSTM kernel --------------------------- #

def _fused_wavefront_kernel(w_ref, x_ref, h0_ref, c0_ref,
                            out_ref, hn_ref, cn_ref, *,
                            T, B, BP, H, D, L,
                            wih0_off, b0_off, wf_off, bias_off, dec_off):
    """Single-launch kernel: all LSTM layers (wavefront over layer x time) + decoder.

    Ref layout (positional):
      w_ref  : (n_rows, L*4H)  packed constants (layer-0 W_ih^T, fused biases,
                               block-bidiagonal recurrence weight, decoder)
      x_ref  : (T*BP, D)       time-major input, each timestep padded to BP=8 rows
      h0_ref / c0_ref : (L, B, H)
      outputs: out_ref (B, 1), hn_ref (L, B, H), cn_ref (L, B, H)
    """
    G = 4 * H

    # ---- one-time unpacking of the packed constant buffer (off the critical path) ----
    wih0 = w_ref[wih0_off:wih0_off + D, 0:G]                # (D, 4H)   layer-0 W_ih^T
    b0 = w_ref[b0_off:b0_off + 1, 0:G]                      # (1, 4H)   fused layer-0 bias
    w_rec = w_ref[wf_off:wf_off + L * H, 0:L * G]           # (L*H, L*4H) fused recurrence
    dec_row = w_ref[dec_off:dec_off + 1, 0:G]               # (1, 4H)
    dec_w = dec_row[:, 0:H]                                 # (1, H)
    dec_b = dec_row[:, H:H + 1]                             # (1, 1)

    # Per-layer biases (layers >= 1); broadcasts hoisted out of the time loop.
    biases = [None]
    for l in range(1, L):
        r = bias_off + 8 * (l - 1)
        biases.append(jnp.broadcast_to(w_ref[r:r + 1, 0:G], (BP, G)))

    # ---- hoisted layer-0 input projection for ALL timesteps: one fat MXU matmul ----
    gx0 = jnp.dot(x_ref[...], wih0, preferred_element_type=jnp.float32) + b0   # (T*BP, 4H)

    # ---- initial states, zero-padded to BP (8-sublane aligned) rows ----
    if BP > B:
        zpad = jnp.zeros((BP - B, H), jnp.float32)
        h_st = [jnp.concatenate([h0_ref[l], zpad], axis=0) for l in range(L)]
        c_st = [jnp.concatenate([c0_ref[l], zpad], axis=0) for l in range(L)]
    else:
        h_st = [h0_ref[l] for l in range(L)]
        c_st = [c0_ref[l] for l in range(L)]

    # ---- wavefront: step s runs layer l at time t = s - l.  One fused MXU push per
    # step (N = L*4H) instead of one per layer per timestep -> chain length T+L-1.
    # TODO(synk): switch to lax.fori_loop(..., unroll=k) if T*L grows beyond ~32.
    for s in range(T + L - 1):
        lhs = h_st[0] if L == 1 else jnp.concatenate(h_st, axis=1)        # (BP, L*H)
        fused = jnp.dot(lhs, w_rec, preferred_element_type=jnp.float32)   # (BP, L*4H)
        for l in range(L):
            t = s - l
            if t < 0 or t >= T:
                continue                    # static warm-up / drain of the wavefront
            part = fused[:, l * G:(l + 1) * G]                            # (BP, 4H)
            if l == 0:
                gates = gx0[t * BP:(t + 1) * BP, :] + part
            else:
                gates = part + biases[l]
            # One full-width sigmoid, tanh only on the g slice (gate order i,f,g,o).
            sig = jax.nn.sigmoid(gates)
            g = jnp.tanh(gates[:, 2 * H:3 * H])
            c_new = sig[:, H:2 * H] * c_st[l] + sig[:, 0:H] * g
            h_st[l] = sig[:, 3 * H:4 * H] * jnp.tanh(c_new)
            c_st[l] = c_new

    # ---- finalize: (hn, cn) and the linear decoder on the top layer's last hidden ----
    for l in range(L):
        hn_ref[l] = h_st[l][0:B, :]
        cn_ref[l] = c_st[l][0:B, :]
    # Decoder: VPU broadcast-multiply + lane reduce (final_dropout is identity in eval).
    dec = jnp.sum(h_st[L - 1] * dec_w, axis=-1, keepdims=True) + dec_b    # (BP, 1)
    out_ref[...] = dec[0:B, :]


# ------------------------------ Hoisted prep + forward ------------------------------ #

def build_forward_fn(params):
    """Packs every constant ONCE (hoisted out of the forward path) and returns a
    jitted forward(x, h0, c0) -> (out, (hn, cn)) matching LightweightOriginal.forward
    in eval mode."""
    lstm = params["lstm"]
    L = len(lstm)
    H = lstm[0][1].shape[1]      # w_hh: (4H, H)
    D = lstm[0][0].shape[1]      # layer-0 w_ih: (4H, D)
    G = 4 * H
    LW = L * G                   # packed-buffer lane width (256 for L=2, H=32)

    def r8(n):
        return ((n + 7) // 8) * 8

    # Packed-buffer row layout (all segment offsets 8-sublane aligned).
    wih0_off = 0
    b0_off = r8(D)
    wf_off = b0_off + 8
    bias_off = wf_off + r8(L * H)
    dec_off = bias_off + 8 * (L - 1)
    n_rows = dec_off + 8

    wp = np.zeros((n_rows, LW), np.float32)
    w_ih0, _, b_ih0, b_hh0 = lstm[0]
    wp[wih0_off:wih0_off + D, 0:G] = np.asarray(w_ih0).T
    wp[b0_off, 0:G] = np.asarray(b_ih0) + np.asarray(b_hh0)
    for l in range(L):
        w_ih_l, w_hh_l, b_ih_l, b_hh_l = lstm[l]
        # Fused recurrence weight: column block l holds W_hh_l^T in row block l and
        # (for l >= 1) W_ih_l^T in row block l-1  -> block-bidiagonal (L*H, L*4H).
        wp[wf_off + l * H:wf_off + (l + 1) * H, l * G:(l + 1) * G] = np.asarray(w_hh_l).T
        if l >= 1:
            wp[wf_off + (l - 1) * H:wf_off + l * H, l * G:(l + 1) * G] = np.asarray(w_ih_l).T
            wp[bias_off + 8 * (l - 1), 0:G] = np.asarray(b_ih_l) + np.asarray(b_hh_l)
    wp[dec_off, 0:H] = np.asarray(params["dec_w"]).reshape(-1)
    wp[dec_off, H] = np.asarray(params["dec_b"]).reshape(-1)[0]
    w_packed = jnp.asarray(wp)

    @jax.jit
    def forward(x, h0, c0):
        B, T, Dx = x.shape
        assert Dx == D
        BP = r8(B)   # pad each timestep's row block to an 8-sublane boundary

        # Time-major, batch-padded to BP, flattened -> (T*BP, D); fuses into this jit.
        xt = jnp.transpose(x, (1, 0, 2)).astype(jnp.float32)      # (T, B, D)
        if BP > B:
            xt = jnp.pad(xt, ((0, 0), (0, BP - B), (0, 0)))
        x_flat = xt.reshape(T * BP, D)

        kernel = functools.partial(
            _fused_wavefront_kernel, T=T, B=B, BP=BP, H=H, D=D, L=L,
            wih0_off=wih0_off, b0_off=b0_off, wf_off=wf_off,
            bias_off=bias_off, dec_off=dec_off)

        out, hn, cn = pl.pallas_call(
            kernel,
            out_shape=(
                jax.ShapeDtypeStruct((B, 1), jnp.float32),
                jax.ShapeDtypeStruct((L, B, H), jnp.float32),
                jax.ShapeDtypeStruct((L, B, H), jnp.float32),
            ),
            grid=(1,),
            in_specs=[
                pl.BlockSpec((n_rows, LW), lambda i: (0, 0)),
                pl.BlockSpec((T * BP, D), lambda i: (0, 0)),
                pl.BlockSpec((L, B, H), lambda i: (0, 0, 0)),
                pl.BlockSpec((L, B, H), lambda i: (0, 0, 0)),
            ],
            out_specs=(
                pl.BlockSpec((B, 1), lambda i: (0, 0)),
                pl.BlockSpec((L, B, H), lambda i: (0, 0, 0)),
                pl.BlockSpec((L, B, H), lambda i: (0, 0, 0)),
            ),
            compiler_params=pltpu.CompilerParams(
                # Single-sequence recurrence is inherently serial; on v7x with many
                # independent sequences, add a leading "parallel" batch-group axis
                # to use the second TensorCore.
                dimension_semantics=("arbitrary",),
            ),
        )(w_packed, x_flat, h0.astype(jnp.float32), c0.astype(jnp.float32))
        return out, (hn, cn)

    return forward


# ----------------------------- Pure-JAX reference ----------------------------------- #

def _reference_forward(params, x, h0, c0):
    """Straightforward per-step LSTM reference (matches torch nn.LSTM math, eval mode)."""
    num_layers = len(params["lstm"])
    B, T, _ = x.shape
    H = params["lstm"][0][1].shape[1]
    seq = jnp.transpose(x, (1, 0, 2)).astype(jnp.float32)      # (T, B, D)
    hns, cns = [], []
    for l in range(num_layers):
        w_ih, w_hh, b_ih, b_hh = params["lstm"][l]
        h, c = h0[l], c0[l]
        outs = []
        for t in range(T):
            gates = seq[t] @ w_ih.T + h @ w_hh.T + b_ih + b_hh
            i_g = jax.nn.sigmoid(gates[:, 0 * H:1 * H])
            f_g = jax.nn.sigmoid(gates[:, 1 * H:2 * H])
            g_g = jnp.tanh(gates[:, 2 * H:3 * H])
            o_g = jax.nn.sigmoid(gates[:, 3 * H:4 * H])
            c = f_g * c + i_g * g_g
            h = o_g * jnp.tanh(c)
            outs.append(h)
        seq = jnp.stack(outs, axis=0)
        hns.append(h)
        cns.append(c)
    out = hns[-1] @ params["dec_w"].T + params["dec_b"]
    return out, (jnp.stack(hns, 0), jnp.stack(cns, 0))


# --------------------------------- Param init ---------------------------------------- #

def init_params(key, input_dim, hidden_dim, num_layers):
    """Deterministic init matching PyTorch LSTM / Linear parameter shapes."""
    H = hidden_dim
    bound = 1.0 / jnp.sqrt(jnp.float32(H))
    lstm_params = []
    for l in range(num_layers):
        in_l = input_dim if l == 0 else H
        key, k1, k2, k3, k4 = jax.random.split(key, 5)
        w_ih = jax.random.uniform(k1, (4 * H, in_l), jnp.float32, -bound, bound)
        w_hh = jax.random.uniform(k2, (4 * H, H), jnp.float32, -bound, bound)
        b_ih = jax.random.uniform(k3, (4 * H,), jnp.float32, -bound, bound)
        b_hh = jax.random.uniform(k4, (4 * H,), jnp.float32, -bound, bound)
        lstm_params.append((w_ih, w_hh, b_ih, b_hh))
    key, k5, k6 = jax.random.split(key, 3)
    dec_w = jax.random.uniform(k5, (1, H), jnp.float32, -bound, bound)
    dec_b = jax.random.uniform(k6, (1,), jnp.float32, -bound, bound)
    return {"lstm": lstm_params, "dec_w": dec_w, "dec_b": dec_b}


# ------------------------------------ Main -------------------------------------------- #

if __name__ == "__main__":
    B, T, D_IN, H, L = 4, 8, 16, 32, 2

    key = jax.random.PRNGKey(0)
    kp, kx, kh, kc = jax.random.split(key, 4)
    params = init_params(kp, D_IN, H, L)

    x = jax.random.normal(kx, (B, T, D_IN), jnp.float32)
    h0 = jnp.zeros((L, B, H), jnp.float32)   # init_hidden_and_cell_states
    c0 = jnp.zeros((L, B, H), jnp.float32)

    forward = build_forward_fn(params)       # all parameter prep hoisted here, once
    out, (hn, cn) = forward(x, h0, c0)
    jax.block_until_ready((out, hn, cn))

    assert out.shape == (B, 1)
    assert hn.shape == (L, B, H) and cn.shape == (L, B, H)

    # Correctness vs. pure-JAX reference (same math as torch nn.LSTM, eval mode).
    ref_out, (ref_hn, ref_cn) = _reference_forward(params, x, h0, c0)
    assert jnp.allclose(out, ref_out, atol=1e-4, rtol=1e-4)
    assert jnp.allclose(hn, ref_hn, atol=1e-4, rtol=1e-4)
    assert jnp.allclose(cn, ref_cn, atol=1e-4, rtol=1e-4)

    # Also exercise nonzero initial states (validates the in-kernel state padding).
    h0r = jax.random.normal(kh, (L, B, H), jnp.float32) * 0.1
    c0r = jax.random.normal(kc, (L, B, H), jnp.float32) * 0.1
    out2, (hn2, cn2) = forward(x, h0r, c0r)
    ref_out2, (ref_hn2, ref_cn2) = _reference_forward(params, x, h0r, c0r)
    assert jnp.allclose(out2, ref_out2, atol=1e-4, rtol=1e-4)
    assert jnp.allclose(hn2, ref_hn2, atol=1e-4, rtol=1e-4)
    assert jnp.allclose(cn2, ref_cn2, atol=1e-4, rtol=1e-4)

    print("KERNEL_OK")
</pallas_src>

<mosaic_0001>
module attributes {stable_mosaic.version = 11 : i64} {
  func.func @_fused_wavefront_kernel(%arg0: i32, %arg1: memref<104x256xf32, #tpu.memory_space<vmem>>, %arg2: memref<64x16xf32, #tpu.memory_space<vmem>>, %arg3: memref<2x4x32xf32, #tpu.memory_space<vmem>>, %arg4: memref<2x4x32xf32, #tpu.memory_space<vmem>>, %arg5: memref<4x1xf32, #tpu.memory_space<vmem>>, %arg6: memref<2x4x32xf32, #tpu.memory_space<vmem>>, %arg7: memref<2x4x32xf32, #tpu.memory_space<vmem>>) attributes {dimension_semantics = [#tpu.dimension_semantics<arbitrary>], iteration_bounds = array<i64: 1>, scalar_prefetch = 0 : i64, scratch_operands = 0 : i64, tpu.core_type = #tpu.core_type<tc>, window_params = [{pipeline_mode = #tpu.pipeline_mode<synchronous>, transform_indices = @transform_0, window_bounds = array<i64: 104, 256>}, {pipeline_mode = #tpu.pipeline_mode<synchronous>, transform_indices = @transform_1, window_bounds = array<i64: 64, 16>}, {pipeline_mode = #tpu.pipeline_mode<synchronous>, transform_indices = @transform_2, window_bounds = array<i64: 2, 4, 32>}, {pipeline_mode = #tpu.pipeline_mode<synchronous>, transform_indices = @transform_3, window_bounds = array<i64: 2, 4, 32>}, {pipeline_mode = #tpu.pipeline_mode<synchronous>, transform_indices = @transform_4, window_bounds = array<i64: 4, 1>}, {pipeline_mode = #tpu.pipeline_mode<synchronous>, transform_indices = @transform_5, window_bounds = array<i64: 2, 4, 32>}, {pipeline_mode = #tpu.pipeline_mode<synchronous>, transform_indices = @transform_6, window_bounds = array<i64: 2, 4, 32>}]} {
    %c0 = arith.constant 0 : index
    %c0_0 = arith.constant 0 : index
    %0 = vector.load %arg1[%c0, %c0_0] : memref<104x256xf32, #tpu.memory_space<vmem>>, vector<16x128xf32>
    %c16 = arith.constant 16 : index
    %c0_1 = arith.constant 0 : index
    %1 = vector.load %arg1[%c16, %c0_1] : memref<104x256xf32, #tpu.memory_space<vmem>>, vector<1x128xf32>
    %c24 = arith.constant 24 : index
    %c0_2 = arith.constant 0 : index
    %2 = vector.load %arg1[%c24, %c0_2] : memref<104x256xf32, #tpu.memory_space<vmem>>, vector<64x256xf32>
    %c96 = arith.constant 96 : index
    %c0_3 = arith.constant 0 : index
    %3 = vector.load %arg1[%c96, %c0_3] : memref<104x256xf32, #tpu.memory_space<vmem>>, vector<1x128xf32>
    %4 = vector.extract_strided_slice %3 {offsets = [0, 0], sizes = [1, 32], strides = [1, 1]} : vector<1x128xf32> to vector<1x32xf32>
    %5 = vector.extract_strided_slice %3 {offsets = [0, 32], sizes = [1, 1], strides = [1, 1]} : vector<1x128xf32> to vector<1x1xf32>
    %c88 = arith.constant 88 : index
    %c0_4 = arith.constant 0 : index
    %6 = vector.load %arg1[%c88, %c0_4] : memref<104x256xf32, #tpu.memory_space<vmem>>, vector<1x128xf32>
    %7 = vector.shape_cast %6 : vector<1x128xf32> to vector<1x128xf32>
    %8 = vector.broadcast %7 : vector<1x128xf32> to vector<8x128xf32>
    %c0_5 = arith.constant 0 : index
    %c0_6 = arith.constant 0 : index
    %9 = vector.load %arg2[%c0_5, %c0_6] : memref<64x16xf32, #tpu.memory_space<vmem>>, vector<64x16xf32>
    %cst = arith.constant dense<0.000000e+00> : vector<64x128xf32>
    %10 = tpu.matmul %9, %0, %cst {dimension_numbers = #tpu.dot_dimension_numbers<[1], [0], [0], [1], [0, 0, 1, 1], [], []>} : vector<64x16xf32>, vector<16x128xf32>, vector<64x128xf32> -> vector<64x128xf32>
    %11 = vector.broadcast %1 : vector<1x128xf32> to vector<64x128xf32>
    %12 = arith.addf %10, %11 : vector<64x128xf32>
    %cst_7 = arith.constant 0.000000e+00 : f32
    %13 = vector.broadcast %cst_7 : f32 to vector<4x32xf32>
    %c0_8 = arith.constant 0 : index
    %c0_9 = arith.constant 0 : index
    %c0_10 = arith.constant 0 : index
    %14 = vector.load %arg3[%c0_8, %c0_9, %c0_10] : memref<2x4x32xf32, #tpu.memory_space<vmem>>, vector<1x4x32xf32>
    %15 = vector.shape_cast %14 : vector<1x4x32xf32> to vector<4x32xf32>
    %16 = tpu.concatenate %15, %13 in 0 : vector<4x32xf32>, vector<4x32xf32> -> vector<8x32xf32>
    %c1 = arith.constant 1 : index
    %c0_11 = arith.constant 0 : index
    %c0_12 = arith.constant 0 : index
    %17 = vector.load %arg3[%c1, %c0_11, %c0_12] : memref<2x4x32xf32, #tpu.memory_space<vmem>>, vector<1x4x32xf32>
    %18 = vector.shape_cast %17 : vector<1x4x32xf32> to vector<4x32xf32>
    %19 = tpu.concatenate %18, %13 in 0 : vector<4x32xf32>, vector<4x32xf32> -> vector<8x32xf32>
    %c0_13 = arith.constant 0 : index
    %c0_14 = arith.constant 0 : index
    %c0_15 = arith.constant 0 : index
    %20 = vector.load %arg4[%c0_13, %c0_14, %c0_15] : memref<2x4x32xf32, #tpu.memory_space<vmem>>, vector<1x4x32xf32>
    %21 = vector.shape_cast %20 : vector<1x4x32xf32> to vector<4x32xf32>
    %22 = tpu.concatenate %21, %13 in 0 : vector<4x32xf32>, vector<4x32xf32> -> vector<8x32xf32>
    %c1_16 = arith.constant 1 : index
    %c0_17 = arith.constant 0 : index
    %c0_18 = arith.constant 0 : index
    %23 = vector.load %arg4[%c1_16, %c0_17, %c0_18] : memref<2x4x32xf32, #tpu.memory_space<vmem>>, vector<1x4x32xf32>
    %24 = vector.shape_cast %23 : vector<1x4x32xf32> to vector<4x32xf32>
    %25 = tpu.concatenate %24, %13 in 0 : vector<4x32xf32>, vector<4x32xf32> -> vector<8x32xf32>
    %26 = tpu.concatenate %16, %19 in 1 : vector<8x32xf32>, vector<8x32xf32> -> vector<8x64xf32>
    %cst_19 = arith.constant dense<0.000000e+00> : vector<8x256xf32>
    %27 = tpu.matmul %26, %2, %cst_19 {dimension_numbers = #tpu.dot_dimension_numbers<[1], [0], [0], [1], [0, 0, 1, 1], [], []>} : vector<8x64xf32>, vector<64x256xf32>, vector<8x256xf32> -> vector<8x256xf32>
    %28 = vector.extract_strided_slice %27 {offsets = [0, 0], sizes = [8, 128], strides = [1, 1]} : vector<8x256xf32> to vector<8x128xf32>
    %29 = vector.extract_strided_slice %12 {offsets = [0, 0], sizes = [8, 128], strides = [1, 1]} : vector<64x128xf32> to vector<8x128xf32>
    %30 = arith.addf %29, %28 : vector<8x128xf32>
    %31 = arith.negf %30 : vector<8x128xf32>
    %32 = math.exp %31 : vector<8x128xf32>
    %cst_20 = arith.constant 1.000000e+00 : f32
    %33 = vector.broadcast %cst_20 : f32 to vector<8x128xf32>
    %34 = arith.addf %33, %32 : vector<8x128xf32>
    %35 = arith.divf %33, %34 : vector<8x128xf32>
    %36 = vector.extract_strided_slice %30 {offsets = [0, 64], sizes = [8, 32], strides = [1, 1]} : vector<8x128xf32> to vector<8x32xf32>
    %37 = math.tanh %36 : vector<8x32xf32>
    %38 = vector.extract_strided_slice %35 {offsets = [0, 32], sizes = [8, 32], strides = [1, 1]} : vector<8x128xf32> to vector<8x32xf32>
    %39 = arith.mulf %38, %22 : vector<8x32xf32>
    %40 = vector.extract_strided_slice %35 {offsets = [0, 0], sizes = [8, 32], strides = [1, 1]} : vector<8x128xf32> to vector<8x32xf32>
    %41 = arith.mulf %40, %37 : vector<8x32xf32>
    %42 = arith.addf %39, %41 : vector<8x32xf32>
    %43 = vector.extract_strided_slice %35 {offsets = [0, 96], sizes = [8, 32], strides = [1, 1]} : vector<8x128xf32> to vector<8x32xf32>
    %44 = math.tanh %42 : vector<8x32xf32>
    %45 = arith.mulf %43, %44 : vector<8x32xf32>
    %46 = tpu.concatenate %45, %19 in 1 : vector<8x32xf32>, vector<8x32xf32> -> vector<8x64xf32>
    %cst_21 = arith.constant dense<0.000000e+00> : vector<8x256xf32>
    %47 = tpu.matmul %46, %2, %cst_21 {dimension_numbers = #tpu.dot_dimension_numbers<[1], [0], [0], [1], [0, 0, 1, 1], [], []>} : vector<8x64xf32>, vector<64x256xf32>, vector<8x256xf32> -> vector<8x256xf32>
    %48 = vector.extract_strided_slice %47 {offsets = [0, 0], sizes = [8, 128], strides = [1, 1]} : vector<8x256xf32> to vector<8x128xf32>
    %49 = vector.extract_strided_slice %12 {offsets = [8, 0], sizes = [8, 128], strides = [1, 1]} : vector<64x128xf32> to vector<8x128xf32>
    %50 = arith.addf %49, %48 : vector<8x128xf32>
    %51 = arith.negf %50 : vector<8x128xf32>
    %52 = math.exp %51 : vector<8x128xf32>
    %cst_22 = arith.constant 1.000000e+00 : f32
    %53 = vector.broadcast %cst_22 : f32 to vector<8x128xf32>
    %54 = arith.addf %53, %52 : vector<8x128xf32>
    %55 = arith.divf %53, %54 : vector<8x128xf32>
    %56 = vector.extract_strided_slice %50 {offsets = [0, 64], sizes = [8, 32], strides = [1, 1]} : vector<8x128xf32> to vector<8x32xf32>
    %57 = math.tanh %56 : vector<8x32xf32>
    %58 = vector.extract_strided_slice %55 {offsets = [0, 32], sizes = [8, 32], strides = [1, 1]} : vector<8x128xf32> to vector<8x32xf32>
    %59 = arith.mulf %58, %42 : vector<8x32xf32>
    %60 = vector.extract_strided_slice %55 {offsets = [0, 0], sizes = [8, 32], strides = [1, 1]} : vector<8x128xf32> to vector<8x32xf32>
    %61 = arith.mulf %60, %57 : vector<8x32xf32>
    %62 = arith.addf %59, %61 : vector<8x32xf32>
    %63 = vector.extract_strided_slice %55 {offsets = [0, 96], sizes = [8, 32], strides = [1, 1]} : vector<8x128xf32> to vector<8x32xf32>
    %64 = math.tanh %62 : vector<8x32xf32>
    %65 = arith.mulf %63, %64 : vector<8x32xf32>
    %66 = vector.extract_strided_slice %47 {offsets = [0, 128], sizes = [8, 128], strides = [1, 1]} : vector<8x256xf32> to vector<8x128xf32>
    %67 = arith.addf %66, %8 : vector<8x128xf32>
    %68 = arith.negf %67 : vector<8x128xf32>
    %69 = math.exp %68 : vector<8x128xf32>
    %cst_23 = arith.constant 1.000000e+00 : f32
    %70 = vector.broadcast %cst_23 : f32 to vector<8x128xf32>
    %71 = arith.addf %70, %69 : vector<8x128xf32>
    %72 = arith.divf %70, %71 : vector<8x128xf32>
    %73 = vector.extract_strided_slice %67 {offsets = [0, 64], sizes = [8, 32], strides = [1, 1]} : vector<8x128xf32> to vector<8x32xf32>
    %74 = math.tanh %73 : vector<8x32xf32>
    %75 = vector.extract_strided_slice %72 {offsets = [0, 32], sizes = [8, 32], strides = [1, 1]} : vector<8x128xf32> to vector<8x32xf32>
    %76 = arith.mulf %75, %25 : vector<8x32xf32>
    %77 = vector.extract_strided_slice %72 {offsets = [0, 0], sizes = [8, 32], strides = [1, 1]} : vector<8x128xf32> to vector<8x32xf32>
    %78 = arith.mulf %77, %74 : vector<8x32xf32>
    %79 = arith.addf %76, %78 : vector<8x32xf32>
    %80 = vector.extract_strided_slice %72 {offsets = [0, 96], sizes = [8, 32], strides = [1, 1]} : vector<8x128xf32> to vector<8x32xf32>
    %81 = math.tanh %79 : vector<8x32xf32>
    %82 = arith.mulf %80, %81 : vector<8x32xf32>
    %83 = tpu.concatenate %65, %82 in 1 : vector<8x32xf32>, vector<8x32xf32> -> vector<8x64xf32>
    %cst_24 = arith.constant dense<0.000000e+00> : vector<8x256xf32>
    %84 = tpu.matmul %83, %2, %cst_24 {dimension_numbers = #tpu.dot_dimension_numbers<[1], [0], [0], [1], [0, 0, 1, 1], [], []>} : vector<8x64xf32>, vector<64x256xf32>, vector<8x256xf32> -> vector<8x256xf32>
    %85 = vector.extract_strided_slice %84 {offsets = [0, 0], sizes = [8, 128], strides = [1, 1]} : vector<8x256xf32> to vector<8x128xf32>
    %86 = vector.extract_strided_slice %12 {offsets = [16, 0], sizes = [8, 128], strides = [1, 1]} : vector<64x128xf32> to vector<8x128xf32>
    %87 = arith.addf %86, %85 : vector<8x128xf32>
    %88 = arith.negf %87 : vector<8x128xf32>
    %89 = math.exp %88 : vector<8x128xf32>
    %cst_25 = arith.constant 1.000000e+00 : f32
    %90 = vector.broadcast %cst_25 : f32 to vector<8x128xf32>
    %91 = arith.addf %90, %89 : vector<8x128xf32>
    %92 = arith.divf %90, %91 : vector<8x128xf32>
    %93 = vector.extract_strided_slice %87 {offsets = [0, 64], sizes = [8, 32], strides = [1, 1]} : vector<8x128xf32> to vector<8x32xf32>
    %94 = math.tanh %93 : vector<8x32xf32>
    %95 = vector.extract_strided_slice %92 {offsets = [0, 32], sizes = [8, 32], strides = [1, 1]} : vector<8x128xf32> to vector<8x32xf32>
    %96 = arith.mulf %95, %62 : vector<8x32xf32>
    %97 = vector.extract_strided_slice %92 {offsets = [0, 0], sizes = [8, 32], strides = [1, 1]} : vector<8x128xf32> to vector<8x32xf32>
    %98 = arith.mulf %97, %94 : vector<8x32xf32>
    %99 = arith.addf %96, %98 : vector<8x32xf32>
    %100 = vector.extract_strided_slice %92 {offsets = [0, 96], sizes = [8, 32], strides = [1, 1]} : vector<8x128xf32> to vector<8x32xf32>
    %101 = math.tanh %99 : vector<8x32xf32>
    %102 = arith.mulf %100, %101 : vector<8x32xf32>
    %103 = vector.extract_strided_slice %84 {offsets = [0, 128], sizes = [8, 128], strides = [1, 1]} : vector<8x256xf32> to vector<8x128xf32>
    %104 = arith.addf %103, %8 : vector<8x128xf32>
    %105 = arith.negf %104 : vector<8x128xf32>
    %106 = math.exp %105 : vector<8x128xf32>
    %cst_26 = arith.constant 1.000000e+00 : f32
    %107 = vector.broadcast %cst_26 : f32 to vector<8x128xf32>
    %108 = arith.addf %107, %106 : vector<8x128xf32>
    %109 = arith.divf %107, %108 : vector<8x128xf32>
    %110 = vector.extract_strided_slice %104 {offsets = [0, 64], sizes = [8, 32], strides = [1, 1]} : vector<8x128xf32> to vector<8x32xf32>
    %111 = math.tanh %110 : vector<8x32xf32>
    %112 = vector.extract_strided_slice %109 {offsets = [0, 32], sizes = [8, 32], strides = [1, 1]} : vector<8x128xf32> to vector<8x32xf32>
    %113 = arith.mulf %112, %79 : vector<8x32xf32>
    %114 = vector.extract_strided_slice %109 {offsets = [0, 0], sizes = [8, 32], strides = [1, 1]} : vector<8x128xf32> to vector<8x32xf32>
    %115 = arith.mulf %114, %111 : vector<8x32xf32>
    %116 = arith.addf %113, %115 : vector<8x32xf32>
    %117 = vector.extract_strided_slice %109 {offsets = [0, 96], sizes = [8, 32], strides = [1, 1]} : vector<8x128xf32> to vector<8x32xf32>
    %118 = math.tanh %116 : vector<8x32xf32>
    %119 = arith.mulf %117, %118 : vector<8x32xf32>
    %120 = tpu.concatenate %102, %119 in 1 : vector<8x32xf32>, vector<8x32xf32> -> vector<8x64xf32>
    %cst_27 = arith.constant dense<0.000000e+00> : vector<8x256xf32>
    %121 = tpu.matmul %120, %2, %cst_27 {dimension_numbers = #tpu.dot_dimension_numbers<[1], [0], [0], [1], [0, 0, 1, 1], [], []>} : vector<8x64xf32>, vector<64x256xf32>, vector<8x256xf32> -> vector<8x256xf32>
    %122 = vector.extract_strided_slice %121 {offsets = [0, 0], sizes = [8, 128], strides = [1, 1]} : vector<8x256xf32> to vector<8x128xf32>
    %123 = vector.extract_strided_slice %12 {offsets = [24, 0], sizes = [8, 128], strides = [1, 1]} : vector<64x128xf32> to vector<8x128xf32>
    %124 = arith.addf %123, %122 : vector<8x128xf32>
    %125 = arith.negf %124 : vector<8x128xf32>
    %126 = math.exp %125 : vector<8x128xf32>
    %cst_28 = arith.constant 1.000000e+00 : f32
    %127 = vector.broadcast %cst_28 : f32 to vector<8x128xf32>
    %128 = arith.addf %127, %126 : vector<8x128xf32>
    %129 = arith.divf %127, %128 : vector<8x128xf32>
    %130 = vector.extract_strided_slice %124 {offsets = [0, 64], sizes = [8, 32], strides = [1, 1]} : vector<8x128xf32> to vector<8x32xf32>
    %131 = math.tanh %130 : vector<8x32xf32>
    %132 = vector.extract_strided_slice %129 {offsets = [0, 32], sizes = [8, 32], strides = [1, 1]} : vector<8x128xf32> to vector<8x32xf32>
    %133 = arith.mulf %132, %99 : vector<8x32xf32>
    %134 = vector.extract_strided_slice %129 {offsets = [0, 0], sizes = [8, 32], strides = [1, 1]} : vector<8x128xf32> to vector<8x32xf32>
    %135 = arith.mulf %134, %131 : vector<8x32xf32>
    %136 = arith.addf %133, %135 : vector<8x32xf32>
    %137 = vector.extract_strided_slice %129 {offsets = [0, 96], sizes = [8, 32], strides = [1, 1]} : vector<8x128xf32> to vector<8x32xf32>
    %138 = math.tanh %136 : vector<8x32xf32>
    %139 = arith.mulf %137, %138 : vector<8x32xf32>
    %140 = vector.extract_strided_slice %121 {offsets = [0, 128], sizes = [8, 128], strides = [1, 1]} : vector<8x256xf32> to vector<8x128xf32>
    %141 = arith.addf %140, %8 : vector<8x128xf32>
    %142 = arith.negf %141 : vector<8x128xf32>
    %143 = math.exp %142 : vector<8x128xf32>
    %cst_29 = arith.constant 1.000000e+00 : f32
    %144 = vector.broadcast %cst_29 : f32 to vector<8x128xf32>
    %145 = arith.addf %144, %143 : vector<8x128xf32>
    %146 = arith.divf %144, %145 : vector<8x128xf32>
    %147 = vector.extract_strided_slice %141 {offsets = [0, 64], sizes = [8, 32], strides = [1, 1]} : vector<8x128xf32> to vector<8x32xf32>
    %148 = math.tanh %147 : vector<8x32xf32>
    %149 = vector.extract_strided_slice %146 {offsets = [0, 32], sizes = [8, 32], strides = [1, 1]} : vector<8x128xf32> to vector<8x32xf32>
    %150 = arith.mulf %149, %116 : vector<8x32xf32>
    %151 = vector.extract_strided_slice %146 {offsets = [0, 0], sizes = [8, 32], strides = [1, 1]} : vector<8x128xf32> to vector<8x32xf32>
    %152 = arith.mulf %151, %148 : vector<8x32xf32>
    %153 = arith.addf %150, %152 : vector<8x32xf32>
    %154 = vector.extract_strided_slice %146 {offsets = [0, 96], sizes = [8, 32], strides = [1, 1]} : vector<8x128xf32> to vector<8x32xf32>
    %155 = math.tanh %153 : vector<8x32xf32>
    %156 = arith.mulf %154, %155 : vector<8x32xf32>
    %157 = tpu.concatenate %139, %156 in 1 : vector<8x32xf32>, vector<8x32xf32> -> vector<8x64xf32>
    %cst_30 = arith.constant dense<0.000000e+00> : vector<8x256xf32>
    %158 = tpu.matmul %157, %2, %cst_30 {dimension_numbers = #tpu.dot_dimension_numbers<[1], [0], [0], [1], [0, 0, 1, 1], [], []>} : vector<8x64xf32>, vector<64x256xf32>, vector<8x256xf32> -> vector<8x256xf32>
    %159 = vector.extract_strided_slice %158 {offsets = [0, 0], sizes = [8, 128], strides = [1, 1]} : vector<8x256xf32> to vector<8x128xf32>
    %160 = vector.extract_strided_slice %12 {offsets = [32, 0], sizes = [8, 128], strides = [1, 1]} : vector<64x128xf32> to vector<8x128xf32>
    %161 = arith.addf %160, %159 : vector<8x128xf32>
    %162 = arith.negf %161 : vector<8x128xf32>
    %163 = math.exp %162 : vector<8x128xf32>
    %cst_31 = arith.constant 1.000000e+00 : f32
    %164 = vector.broadcast %cst_31 : f32 to vector<8x128xf32>
    %165 = arith.addf %164, %163 : vector<8x128xf32>
    %166 = arith.divf %164, %165 : vector<8x128xf32>
    %167 = vector.extract_strided_slice %161 {offsets = [0, 64], sizes = [8, 32], strides = [1, 1]} : vector<8x128xf32> to vector<8x32xf32>
    %168 = math.tanh %167 : vector<8x32xf32>
    %169 = vector.extract_strided_slice %166 {offsets = [0, 32], sizes = [8, 32], strides = [1, 1]} : vector<8x128xf32> to vector<8x32xf32>
    %170 = arith.mulf %169, %136 : vector<8x32xf32>
    %171 = vector.extract_strided_slice %166 {offsets = [0, 0], sizes = [8, 32], strides = [1, 1]} : vector<8x128xf32> to vector<8x32xf32>
    %172 = arith.mulf %171, %168 : vector<8x32xf32>
    %173 = arith.addf %170, %172 : vector<8x32xf32>
    %174 = vector.extract_strided_slice %166 {offsets = [0, 96], sizes = [8, 32], strides = [1, 1]} : vector<8x128xf32> to vector<8x32xf32>
    %175 = math.tanh %173 : vector<8x32xf32>
    %176 = arith.mulf %174, %175 : vector<8x32xf32>
    %177 = vector.extract_strided_slice %158 {offsets = [0, 128], sizes = [8, 128], strides = [1, 1]} : vector<8x256xf32> to vector<8x128xf32>
    %178 = arith.addf %177, %8 : vector<8x128xf32>
    %179 = arith.negf %178 : vector<8x128xf32>
    %180 = math.exp %179 : vector<8x128xf32>
    %cst_32 = arith.constant 1.000000e+00 : f32
    %181 = vector.broadcast %cst_32 : f32 to vector<8x128xf32>
    %182 = arith.addf %181, %180 : vector<8x128xf32>
    %183 = arith.divf %181, %182 : vector<8x128xf32>
    %184 = vector.extract_strided_slice %178 {offsets = [0, 64], sizes = [8, 32], strides = [1, 1]} : vector<8x128xf32> to vector<8x32xf32>
    %185 = math.tanh %184 : vector<8x32xf32>
    %186 = vector.extract_strided_slice %183 {offsets = [0, 32], sizes = [8, 32], strides = [1, 1]} : vector<8x128xf32> to vector<8x32xf32>
    %187 = arith.mulf %186, %153 : vector<8x32xf32>
    %188 = vector.extract_strided_slice %183 {offsets = [0, 0], sizes = [8, 32], strides = [1, 1]} : vector<8x128xf32> to vector<8x32xf32>
    %189 = arith.mulf %188, %185 : vector<8x32xf32>
    %190 = arith.addf %187, %189 : vector<8x32xf32>
    %191 = vector.extract_strided_slice %183 {offsets = [0, 96], sizes = [8, 32], strides = [1, 1]} : vector<8x128xf32> to vector<8x32xf32>
    %192 = math.tanh %190 : vector<8x32xf32>
    %193 = arith.mulf %191, %192 : vector<8x32xf32>
    %194 = tpu.concatenate %176, %193 in 1 : vector<8x32xf32>, vector<8x32xf32> -> vector<8x64xf32>
    %cst_33 = arith.constant dense<0.000000e+00> : vector<8x256xf32>
    %195 = tpu.matmul %194, %2, %cst_33 {dimension_numbers = #tpu.dot_dimension_numbers<[1], [0], [0], [1], [0, 0, 1, 1], [], []>} : vector<8x64xf32>, vector<64x256xf32>, vector<8x256xf32> -> vector<8x256xf32>
    %196 = vector.extract_strided_slice %195 {offsets = [0, 0], sizes = [8, 128], strides = [1, 1]} : vector<8x256xf32> to vector<8x128xf32>
    %197 = vector.extract_strided_slice %12 {offsets = [40, 0], sizes = [8, 128], strides = [1, 1]} : vector<64x128xf32> to vector<8x128xf32>
    %198 = arith.addf %197, %196 : vector<8x128xf32>
    %199 = arith.negf %198 : vector<8x128xf32>
    %200 = math.exp %199 : vector<8x128xf32>
    %cst_34 = arith.constant 1.000000e+00 : f32
    %201 = vector.broadcast %cst_34 : f32 to vector<8x128xf32>
    %202 = arith.addf %201, %200 : vector<8x128xf32>
    %203 = arith.divf %201, %202 : vector<8x128xf32>
    %204 = vector.extract_strided_slice %198 {offsets = [0, 64], sizes = [8, 32], strides = [1, 1]} : vector<8x128xf32> to vector<8x32xf32>
    %205 = math.tanh %204 : vector<8x32xf32>
    %206 = vector.extract_strided_slice %203 {offsets = [0, 32], sizes = [8, 32], strides = [1, 1]} : vector<8x128xf32> to vector<8x32xf32>
    %207 = arith.mulf %206, %173 : vector<8x32xf32>
    %208 = vector.extract_strided_slice %203 {offsets = [0, 0], sizes = [8, 32], strides = [1, 1]} : vector<8x128xf32> to vector<8x32xf32>
    %209 = arith.mulf %208, %205 : vector<8x32xf32>
    %210 = arith.addf %207, %209 : vector<8x32xf32>
    %211 = vector.extract_strided_slice %203 {offsets = [0, 96], sizes = [8, 32], strides = [1, 1]} : vector<8x128xf32> to vector<8x32xf32>
    %212 = math.tanh %210 : vector<8x32xf32>
    %213 = arith.mulf %211, %212 : vector<8x32xf32>
    %214 = vector.extract_strided_slice %195 {offsets = [0, 128], sizes = [8, 128], strides = [1, 1]} : vector<8x256xf32> to vector<8x128xf32>
    %215 = arith.addf %214, %8 : vector<8x128xf32>
    %216 = arith.negf %215 : vector<8x128xf32>
    %217 = math.exp %216 : vector<8x128xf32>
    %cst_35 = arith.constant 1.000000e+00 : f32
    %218 = vector.broadcast %cst_35 : f32 to vector<8x128xf32>
    %219 = arith.addf %218, %217 : vector<8x128xf32>
    %220 = arith.divf %218, %219 : vector<8x128xf32>
    %221 = vector.extract_strided_slice %215 {offsets = [0, 64], sizes = [8, 32], strides = [1, 1]} : vector<8x128xf32> to vector<8x32xf32>
    %222 = math.tanh %221 : vector<8x32xf32>
    %223 = vector.extract_strided_slice %220 {offsets = [0, 32], sizes = [8, 32], strides = [1, 1]} : vector<8x128xf32> to vector<8x32xf32>
    %224 = arith.mulf %223, %190 : vector<8x32xf32>
    %225 = vector.extract_strided_slice %220 {offsets = [0, 0], sizes = [8, 32], strides = [1, 1]} : vector<8x128xf32> to vector<8x32xf32>
    %226 = arith.mulf %225, %222 : vector<8x32xf32>
    %227 = arith.addf %224, %226 : vector<8x32xf32>
    %228 = vector.extract_strided_slice %220 {offsets = [0, 96], sizes = [8, 32], strides = [1, 1]} : vector<8x128xf32> to vector<8x32xf32>
    %229 = math.tanh %227 : vector<8x32xf32>
    %230 = arith.mulf %228, %229 : vector<8x32xf32>
    %231 = tpu.concatenate %213, %230 in 1 : vector<8x32xf32>, vector<8x32xf32> -> vector<8x64xf32>
    %cst_36 = arith.constant dense<0.000000e+00> : vector<8x256xf32>
    %232 = tpu.matmul %231, %2, %cst_36 {dimension_numbers = #tpu.dot_dimension_numbers<[1], [0], [0], [1], [0, 0, 1, 1], [], []>} : vector<8x64xf32>, vector<64x256xf32>, vector<8x256xf32> -> vector<8x256xf32>
    %233 = vector.extract_strided_slice %232 {offsets = [0, 0], sizes = [8, 128], strides = [1, 1]} : vector<8x256xf32> to vector<8x128xf32>
    %234 = vector.extract_strided_slice %12 {offsets = [48, 0], sizes = [8, 128], strides = [1, 1]} : vector<64x128xf32> to vector<8x128xf32>
    %235 = arith.addf %234, %233 : vector<8x128xf32>
    %236 = arith.negf %235 : vector<8x128xf32>
    %237 = math.exp %236 : vector<8x128xf32>
    %cst_37 = arith.constant 1.000000e+00 : f32
    %238 = vector.broadcast %cst_37 : f32 to vector<8x128xf32>
    %239 = arith.addf %238, %237 : vector<8x128xf32>
    %240 = arith.divf %238, %239 : vector<8x128xf32>
    %241 = vector.extract_strided_slice %235 {offsets = [0, 64], sizes = [8, 32], strides = [1, 1]} : vector<8x128xf32> to vector<8x32xf32>
    %242 = math.tanh %241 : vector<8x32xf32>
    %243 = vector.extract_strided_slice %240 {offsets = [0, 32], sizes = [8, 32], strides = [1, 1]} : vector<8x128xf32> to vector<8x32xf32>
    %244 = arith.mulf %243, %210 : vector<8x32xf32>
    %245 = vector.extract_strided_slice %240 {offsets = [0, 0], sizes = [8, 32], strides = [1, 1]} : vector<8x128xf32> to vector<8x32xf32>
    %246 = arith.mulf %245, %242 : vector<8x32xf32>
    %247 = arith.addf %244, %246 : vector<8x32xf32>
    %248 = vector.extract_strided_slice %240 {offsets = [0, 96], sizes = [8, 32], strides = [1, 1]} : vector<8x128xf32> to vector<8x32xf32>
    %249 = math.tanh %247 : vector<8x32xf32>
    %250 = arith.mulf %248, %249 : vector<8x32xf32>
    %251 = vector.extract_strided_slice %232 {offsets = [0, 128], sizes = [8, 128], strides = [1, 1]} : vector<8x256xf32> to vector<8x128xf32>
    %252 = arith.addf %251, %8 : vector<8x128xf32>
    %253 = arith.negf %252 : vector<8x128xf32>
    %254 = math.exp %253 : vector<8x128xf32>
    %cst_38 = arith.constant 1.000000e+00 : f32
    %255 = vector.broadcast %cst_38 : f32 to vector<8x128xf32>
    %256 = arith.addf %255, %254 : vector<8x128xf32>
    %257 = arith.divf %255, %256 : vector<8x128xf32>
    %258 = vector.extract_strided_slice %252 {offsets = [0, 64], sizes = [8, 32], strides = [1, 1]} : vector<8x128xf32> to vector<8x32xf32>
    %259 = math.tanh %258 : vector<8x32xf32>
    %260 = vector.extract_strided_slice %257 {offsets = [0, 32], sizes = [8, 32], strides = [1, 1]} : vector<8x128xf32> to vector<8x32xf32>
    %261 = arith.mulf %260, %227 : vector<8x32xf32>
    %262 = vector.extract_strided_slice %257 {offsets = [0, 0], sizes = [8, 32], strides = [1, 1]} : vector<8x128xf32> to vector<8x32xf32>
    %263 = arith.mulf %262, %259 : vector<8x32xf32>
    %264 = arith.addf %261, %263 : vector<8x32xf32>
    %265 = vector.extract_strided_slice %257 {offsets = [0, 96], sizes = [8, 32], strides = [1, 1]} : vector<8x128xf32> to vector<8x32xf32>
    %266 = math.tanh %264 : vector<8x32xf32>
    %267 = arith.mulf %265, %266 : vector<8x32xf32>
    %268 = tpu.concatenate %250, %267 in 1 : vector<8x32xf32>, vector<8x32xf32> -> vector<8x64xf32>
    %cst_39 = arith.constant dense<0.000000e+00> : vector<8x256xf32>
    %269 = tpu.matmul %268, %2, %cst_39 {dimension_numbers = #tpu.dot_dimension_numbers<[1], [0], [0], [1], [0, 0, 1, 1], [], []>} : vector<8x64xf32>, vector<64x256xf32>, vector<8x256xf32> -> vector<8x256xf32>
    %270 = vector.extract_strided_slice %269 {offsets = [0, 0], sizes = [8, 128], strides = [1, 1]} : vector<8x256xf32> to vector<8x128xf32>
    %271 = vector.extract_strided_slice %12 {offsets = [56, 0], sizes = [8, 128], strides = [1, 1]} : vector<64x128xf32> to vector<8x128xf32>
    %272 = arith.addf %271, %270 : vector<8x128xf32>
    %273 = arith.negf %272 : vector<8x128xf32>
    %274 = math.exp %273 : vector<8x128xf32>
    %cst_40 = arith.constant 1.000000e+00 : f32
    %275 = vector.broadcast %cst_40 : f32 to vector<8x128xf32>
    %276 = arith.addf %275, %274 : vector<8x128xf32>
    %277 = arith.divf %275, %276 : vector<8x128xf32>
    %278 = vector.extract_strided_slice %272 {offsets = [0, 64], sizes = [8, 32], strides = [1, 1]} : vector<8x128xf32> to vector<8x32xf32>
    %279 = math.tanh %278 : vector<8x32xf32>
    %280 = vector.extract_strided_slice %277 {offsets = [0, 32], sizes = [8, 32], strides = [1, 1]} : vector<8x128xf32> to vector<8x32xf32>
    %281 = arith.mulf %280, %247 : vector<8x32xf32>
    %282 = vector.extract_strided_slice %277 {offsets = [0, 0], sizes = [8, 32], strides = [1, 1]} : vector<8x128xf32> to vector<8x32xf32>
    %283 = arith.mulf %282, %279 : vector<8x32xf32>
    %284 = arith.addf %281, %283 : vector<8x32xf32>
    %285 = vector.extract_strided_slice %277 {offsets = [0, 96], sizes = [8, 32], strides = [1, 1]} : vector<8x128xf32> to vector<8x32xf32>
    %286 = math.tanh %284 : vector<8x32xf32>
    %287 = arith.mulf %285, %286 : vector<8x32xf32>
    %288 = vector.extract_strided_slice %269 {offsets = [0, 128], sizes = [8, 128], strides = [1, 1]} : vector<8x256xf32> to vector<8x128xf32>
    %289 = arith.addf %288, %8 : vector<8x128xf32>
    %290 = arith.negf %289 : vector<8x128xf32>
    %291 = math.exp %290 : vector<8x128xf32>
    %cst_41 = arith.constant 1.000000e+00 : f32
    %292 = vector.broadcast %cst_41 : f32 to vector<8x128xf32>
    %293 = arith.addf %292, %291 : vector<8x128xf32>
    %294 = arith.divf %292, %293 : vector<8x128xf32>
    %295 = vector.extract_strided_slice %289 {offsets = [0, 64], sizes = [8, 32], strides = [1, 1]} : vector<8x128xf32> to vector<8x32xf32>
    %296 = math.tanh %295 : vector<8x32xf32>
    %297 = vector.extract_strided_slice %294 {offsets = [0, 32], sizes = [8, 32], strides = [1, 1]} : vector<8x128xf32> to vector<8x32xf32>
    %298 = arith.mulf %297, %264 : vector<8x32xf32>
    %299 = vector.extract_strided_slice %294 {offsets = [0, 0], sizes = [8, 32], strides = [1, 1]} : vector<8x128xf32> to vector<8x32xf32>
    %300 = arith.mulf %299, %296 : vector<8x32xf32>
    %301 = arith.addf %298, %300 : vector<8x32xf32>
    %302 = vector.extract_strided_slice %294 {offsets = [0, 96], sizes = [8, 32], strides = [1, 1]} : vector<8x128xf32> to vector<8x32xf32>
    %303 = math.tanh %301 : vector<8x32xf32>
    %304 = arith.mulf %302, %303 : vector<8x32xf32>
    %305 = tpu.concatenate %287, %304 in 1 : vector<8x32xf32>, vector<8x32xf32> -> vector<8x64xf32>
    %cst_42 = arith.constant dense<0.000000e+00> : vector<8x256xf32>
    %306 = tpu.matmul %305, %2, %cst_42 {dimension_numbers = #tpu.dot_dimension_numbers<[1], [0], [0], [1], [0, 0, 1, 1], [], []>} : vector<8x64xf32>, vector<64x256xf32>, vector<8x256xf32> -> vector<8x256xf32>
    %307 = vector.extract_strided_slice %306 {offsets = [0, 128], sizes = [8, 128], strides = [1, 1]} : vector<8x256xf32> to vector<8x128xf32>
    %308 = arith.addf %307, %8 : vector<8x128xf32>
    %309 = arith.negf %308 : vector<8x128xf32>
    %310 = math.exp %309 : vector<8x128xf32>
    %cst_43 = arith.constant 1.000000e+00 : f32
    %311 = vector.broadcast %cst_43 : f32 to vector<8x128xf32>
    %312 = arith.addf %311, %310 : vector<8x128xf32>
    %313 = arith.divf %311, %312 : vector<8x128xf32>
    %314 = vector.extract_strided_slice %308 {offsets = [0, 64], sizes = [8, 32], strides = [1, 1]} : vector<8x128xf32> to vector<8x32xf32>
    %315 = math.tanh %314 : vector<8x32xf32>
    %316 = vector.extract_strided_slice %313 {offsets = [0, 32], sizes = [8, 32], strides = [1, 1]} : vector<8x128xf32> to vector<8x32xf32>
    %317 = arith.mulf %316, %301 : vector<8x32xf32>
    %318 = vector.extract_strided_slice %313 {offsets = [0, 0], sizes = [8, 32], strides = [1, 1]} : vector<8x128xf32> to vector<8x32xf32>
    %319 = arith.mulf %318, %315 : vector<8x32xf32>
    %320 = arith.addf %317, %319 : vector<8x32xf32>
    %321 = vector.extract_strided_slice %313 {offsets = [0, 96], sizes = [8, 32], strides = [1, 1]} : vector<8x128xf32> to vector<8x32xf32>
    %322 = math.tanh %320 : vector<8x32xf32>
    %323 = arith.mulf %321, %322 : vector<8x32xf32>
    %324 = vector.extract_strided_slice %287 {offsets = [0, 0], sizes = [4, 32], strides = [1, 1]} : vector<8x32xf32> to vector<4x32xf32>
    %c0_44 = arith.constant 0 : index
    %c0_45 = arith.constant 0 : index
    %c0_46 = arith.constant 0 : index
    %325 = vector.load %arg6[%c0_44, %c0_45, %c0_46] : memref<2x4x32xf32, #tpu.memory_space<vmem>>, vector<1x4x32xf32>
    %326 = vector.shape_cast %325 : vector<1x4x32xf32> to vector<4x32xf32>
    %327 = vector.shape_cast %324 : vector<4x32xf32> to vector<1x4x32xf32>
    tpu.vector_store %arg6[%c0_44, %c0_45, %c0_46], %327 {strides = array<i32>} : memref<2x4x32xf32, #tpu.memory_space<vmem>>, vector<1x4x32xf32>,
    %328 = vector.extract_strided_slice %284 {offsets = [0, 0], sizes = [4, 32], strides = [1, 1]} : vector<8x32xf32> to vector<4x32xf32>
    %c0_47 = arith.constant 0 : index
    %c0_48 = arith.constant 0 : index
    %c0_49 = arith.constant 0 : index
    %329 = vector.load %arg7[%c0_47, %c0_48, %c0_49] : memref<2x4x32xf32, #tpu.memory_space<vmem>>, vector<1x4x32xf32>
    %330 = vector.shape_cast %329 : vector<1x4x32xf32> to vector<4x32xf32>
    %331 = vector.shape_cast %328 : vector<4x32xf32> to vector<1x4x32xf32>
    tpu.vector_store %arg7[%c0_47, %c0_48, %c0_49], %331 {strides = array<i32>} : memref<2x4x32xf32, #tpu.memory_space<vmem>>, vector<1x4x32xf32>,
    %332 = vector.extract_strided_slice %323 {offsets = [0, 0], sizes = [4, 32], strides = [1, 1]} : vector<8x32xf32> to vector<4x32xf32>
    %c1_50 = arith.constant 1 : index
    %c0_51 = arith.constant 0 : index
    %c0_52 = arith.constant 0 : index
    %333 = vector.load %arg6[%c1_50, %c0_51, %c0_52] : memref<2x4x32xf32, #tpu.memory_space<vmem>>, vector<1x4x32xf32>
    %334 = vector.shape_cast %333 : vector<1x4x32xf32> to vector<4x32xf32>
    %335 = vector.shape_cast %332 : vector<4x32xf32> to vector<1x4x32xf32>
    tpu.vector_store %arg6[%c1_50, %c0_51, %c0_52], %335 {strides = array<i32>} : memref<2x4x32xf32, #tpu.memory_space<vmem>>, vector<1x4x32xf32>,
    %336 = vector.extract_strided_slice %320 {offsets = [0, 0], sizes = [4, 32], strides = [1, 1]} : vector<8x32xf32> to vector<4x32xf32>
    %c1_53 = arith.constant 1 : index
    %c0_54 = arith.constant 0 : index
    %c0_55 = arith.constant 0 : index
    %337 = vector.load %arg7[%c1_53, %c0_54, %c0_55] : memref<2x4x32xf32, #tpu.memory_space<vmem>>, vector<1x4x32xf32>
    %338 = vector.shape_cast %337 : vector<1x4x32xf32> to vector<4x32xf32>
    %339 = vector.shape_cast %336 : vector<4x32xf32> to vector<1x4x32xf32>
    tpu.vector_store %arg7[%c1_53, %c0_54, %c0_55], %339 {strides = array<i32>} : memref<2x4x32xf32, #tpu.memory_space<vmem>>, vector<1x4x32xf32>,
    %340 = vector.broadcast %4 : vector<1x32xf32> to vector<8x32xf32>
    %341 = arith.mulf %323, %340 : vector<8x32xf32>
    %cst_56 = arith.constant dense<0.000000e+00> : vector<8xf32>
    %342 = vector.multi_reduction <add>, %341, %cst_56 [1] : vector<8x32xf32> to vector<8xf32>
    %343 = vector.shape_cast %342 : vector<8xf32> to vector<8x1xf32>
    %344 = vector.broadcast %5 : vector<1x1xf32> to vector<8x1xf32>
    %345 = arith.addf %343, %344 : vector<8x1xf32>
    %346 = vector.extract_strided_slice %345 {offsets = [0, 0], sizes = [4, 1], strides = [1, 1]} : vector<8x1xf32> to vector<4x1xf32>
    %c0_57 = arith.constant 0 : index
    %c0_58 = arith.constant 0 : index
    %347 = vector.load %arg5[%c0_57, %c0_58] : memref<4x1xf32, #tpu.memory_space<vmem>>, vector<4x1xf32>
    tpu.vector_store %arg5[%c0_57, %c0_58], %346 {strides = array<i32>} : memref<4x1xf32, #tpu.memory_space<vmem>>, vector<4x1xf32>,
    return
  }
  func.func @transform_0(%arg0: i32) -> (i32, i32) {
    %c0_i32 = arith.constant 0 : i32
    %c0_i32_0 = arith.constant 0 : i32
    %c0_i32_1 = arith.constant 0 : i32
    return %c0_i32, %c0_i32_0 : i32, i32
  }
  func.func @transform_1(%arg0: i32) -> (i32, i32) {
    %c0_i32 = arith.constant 0 : i32
    %c0_i32_0 = arith.constant 0 : i32
    %c0_i32_1 = arith.constant 0 : i32
    return %c0_i32, %c0_i32_0 : i32, i32
  }
  func.func @transform_2(%arg0: i32) -> (i32, i32, i32) {
    %c0_i32 = arith.constant 0 : i32
    %c0_i32_0 = arith.constant 0 : i32
    %c0_i32_1 = arith.constant 0 : i32
    %c0_i32_2 = arith.constant 0 : i32
    return %c0_i32, %c0_i32_0, %c0_i32_1 : i32, i32, i32
  }
  func.func @transform_3(%arg0: i32) -> (i32, i32, i32) {
    %c0_i32 = arith.constant 0 : i32
    %c0_i32_0 = arith.constant 0 : i32
    %c0_i32_1 = arith.constant 0 : i32
    %c0_i32_2 = arith.constant 0 : i32
    return %c0_i32, %c0_i32_0, %c0_i32_1 : i32, i32, i32
  }
  func.func @transform_4(%arg0: i32) -> (i32, i32) {
    %c0_i32 = arith.constant 0 : i32
    %c0_i32_0 = arith.constant 0 : i32
    %c0_i32_1 = arith.constant 0 : i32
    return %c0_i32, %c0_i32_0 : i32, i32
  }
  func.func @transform_5(%arg0: i32) -> (i32, i32, i32) {
    %c0_i32 = arith.constant 0 : i32
    %c0_i32_0 = arith.constant 0 : i32
    %c0_i32_1 = arith.constant 0 : i32
    %c0_i32_2 = arith.constant 0 : i32
    return %c0_i32, %c0_i32_0, %c0_i32_1 : i32, i32, i32
  }
  func.func @transform_6(%arg0: i32) -> (i32, i32, i32) {
    %c0_i32 = arith.constant 0 : i32
    %c0_i32_0 = arith.constant 0 : i32
    %c0_i32_1 = arith.constant 0 : i32
    %c0_i32_2 = arith.constant 0 : i32
    return %c0_i32, %c0_i32_0, %c0_i32_1 : i32, i32, i32
  }
}

</mosaic_0001>

<llo_original>
// kernel: forward.1
$region0: #{forward.1}
  #allocation0 [shape = 'u32[]', space=smem, size = 0x4, offset = 0x4, fixed_abs, tag = 'smem constant byte address 0x4 - core index']
  #allocation1 [shape = 'u32[144,128]{1,0:T(1,128)}', space=vmem, size = 0x12000, scoped, tag = 'internal scratch']
  %s0 = inlined_call_operand.hbm [shape: f32[104,256], index: 0, kind: input, shape index: {}]
  %s1 = inlined_call_operand.vmem [shape: f32[64,16], index: 1, kind: input, shape index: {}]
  %s2 = inlined_call_operand.vmem [shape: f32[2,4,32], index: 2, kind: input, shape index: {}]
  %s3 = inlined_call_operand.vmem [shape: f32[2,4,32], index: 3, kind: input, shape index: {}]
  %s4 = inlined_call_operand.vmem [shape: f32[4,1], index: 4, kind: output, shape index: {0}]
  %s5 = inlined_call_operand.hbm [shape: f32[2,4,32], index: 5, kind: output, shape index: {1}]
  %s6 = inlined_call_operand.hbm [shape: f32[2,4,32], index: 6, kind: output, shape index: {2}]
  %7 = xla_tuple %s4, %s5, %s6
  %s8 = sld [smem:[#allocation0]]
  $region46: #{forward.1} parent=0
    _
  %s10 = ssub.s32 1, %s8
  %s11 = scalar_select 0, %s10, %s8
  $region1: #{forward.1} parent=0
    #allocation2 [shape = 'u8[106496]{0}', space=vmem, size = 0x1a000, scoped, tag = 'input window, operand 0, single buffered']
    #allocation3 [shape = 's32[1]{0}', space=sflag, size = 0x4, scoped, tag = 'scoped memory for forward.1']
    #allocation4 [shape = 's32[1]{0}', space=sflag, size = 0x4, scoped, tag = 'scoped memory for forward.1']
    #allocation5 [shape = 'u8[4096]{0}', space=vmem, size = 0x1000, scoped, tag = 'output window, operand 1, single buffered']
    #allocation6 [shape = 'u8[4096]{0}', space=vmem, size = 0x1000, scoped, tag = 'output window, operand 2, single buffered']
    #allocation7 [shape = 's32[1]{0}', space=sflag, size = 0x4, scoped, tag = 'scoped memory for forward.1']
    %12 = vsyncpa [#allocation3], 0
    %13 = vsyncpa [#allocation4], 0
    %14 = vsyncpa [#allocation7], 0
    // Predicated region
    $region2: #{forward.1} parent=1 // pred_check
      _
    $region3: #{forward.1} parent=1 // pred_check_branch
      %16 = sbr.rel (0) target = $region5
    $region4: #{forward.1} parent=1 // pred_region
      %s18 = ssub.s32 3328, 3328
      %19 = vsyncadd [#allocation3], %s18
      %s20 = sshll.u32 [#allocation2], 4
      %s21 = int_to_ptr.vmem [resolvable:$true] %s20
      %26 = dma.hbm_to_vmem [thread:$0]  %s0, 3328, %s21, [#allocation3], 256, 256, 16
    $region5: #{forward.1} parent=1 // pred_fallthru
      _
    // Predicated region
    $region6: #{forward.1} parent=1 // pred_check
      _
    $region7: #{forward.1} parent=1 // pred_check_branch
      %28 = sbr.rel (0) target = $region9
    $region8: #{forward.1} parent=1 // pred_region
      _
    $region9: #{forward.1} parent=1 // pred_fallthru
      _
    // Predicated region
    $region10: #{forward.1} parent=1 // pred_check
      _
    $region11: #{forward.1} parent=1 // pred_check_branch
      %30 = sbr.rel (0) target = $region13
    $region12: #{forward.1} parent=1 // pred_region
      _
    $region13: #{forward.1} parent=1 // pred_fallthru
      _
    // Predicated region
    $region14: #{forward.1} parent=1 // pred_check
      _
    $region15: #{forward.1} parent=1 // pred_check_branch
      %32 = sbr.rel (0) target = $region17
    $region16: #{forward.1} parent=1 // pred_region
      _
    $region17: #{forward.1} parent=1 // pred_fallthru
      _
    // Predicated region
    $region18: #{forward.1} parent=1 // pred_check
      _
    $region19: #{forward.1} parent=1 // pred_check_branch
      %34 = sbr.rel (0) target = $region21
    $region20: #{forward.1} parent=1 // pred_region
      %35 = dma.done [#allocation3], 3328
    $region21: #{forward.1} parent=1 // pred_fallthru
      _
    %v36 = vld [vmem:[#allocation2] sm:$0xff]
    %v37 = vld [vmem:[#allocation2 + $0x10] sm:$0xff]
    %v38 = vld [vmem:[#allocation2 + $0x20] ss:$0 sm:$0xff]
    %v39 = vld [vmem:[#allocation2 + $0x30] sm:$0xff]
    %v40 = vld [vmem:[#allocation2 + $0x38] sm:$0xff]
    %v41 = vld [vmem:[#allocation2 + $0x40] sm:$0xff]
    %v42 = vld [vmem:[#allocation2 + $0x48] sm:$0xff]
    %v43 = vld [vmem:[#allocation2 + $0x50] sm:$0xff]
    %v44 = vld [vmem:[#allocation2 + $0x58] sm:$0xff]
    %v45 = vld [vmem:[#allocation2 + $0x60] sm:$0xff]
    %v46 = vld [vmem:[#allocation2 + $0x68] sm:$0xff]
    %v47 = vld [vmem:[#allocation2 + $0x70] sm:$0xff]
    %v48 = vld [vmem:[#allocation2 + $0x78] sm:$0xff]
    %v49 = vld [vmem:[#allocation2 + $0x80] sm:$0xff]
    %v50 = vld [vmem:[#allocation2 + $0x88] sm:$0xff]
    %v51 = vld [vmem:[#allocation2 + $0x90] sm:$0xff]
    %v52 = vld [vmem:[#allocation2 + $0x98] sm:$0xff]
    %v53 = vld [vmem:[#allocation2 + $0xa0] sm:$0xff]
    %v54 = vld [vmem:[#allocation2 + $0xa8] sm:$0xff]
    %v55 = vld [vmem:[#allocation2 + $0xc0] ss:$0 sm:$0xff]
    %v56 = vld [vmem:[#allocation2 + $0xb0] ss:$0 sm:$0xff]
    %v57 = vld [vmem:[%s1] sm:$0xff]
    %v58 = vld [vmem:[%s1 + $0x8] sm:$0xff]
    %v59 = vld [vmem:[%s1 + $0x10] sm:$0xff]
    %v60 = vld [vmem:[%s1 + $0x18] sm:$0xff]
    %v61 = vld [vmem:[%s1 + $0x20] sm:$0xff]
    %v62 = vld [vmem:[%s1 + $0x28] sm:$0xff]
    %v63 = vld [vmem:[%s1 + $0x30] sm:$0xff]
    %v64 = vld [vmem:[%s1 + $0x38] sm:$0xff]
    %vm65 = vcmask 130048
    %v67 = vsel %vm65, %v57, 0
    %v70 = vsel %vm65, %v58, 0
    %v73 = vsel %vm65, %v59, 0
    %v76 = vsel %vm65, %v60, 0
    %v79 = vsel %vm65, %v61, 0
    %v82 = vsel %vm65, %v62, 0
    %v85 = vsel %vm65, %v63, 0
    %v88 = vsel %vm65, %v64, 0
    %90 = vmatprep.subr.mxu0 0.0
    %91 = vmatpush1.msra.mxu0 %v36
    %92 = vmatprep.subr.mxu0 0.0
    %93 = vmatpush1.msra.mxu0 %v37
    %94 = vmatprep.subr.mxu0 0.0
    %95 = vmatpush1.msra.mxu0 0.0
    %96 = vmatprep.subr.mxu0 0.0
    %97 = vmatpush1.msra.mxu0 0.0
    %98 = vmatprep.subr.mxu0 0.0
    %99 = vmatpush1.msra.mxu0 0.0
    %100 = vmatprep.subr.mxu0 0.0
    %101 = vmatpush1.msra.mxu0 0.0
    %102 = vmatprep.subr.mxu0 0.0
    %103 = vmatpush1.msra.mxu0 0.0
    %104 = vmatprep.subr.mxu0 0.0
    %105 = vmatpush1.msra.mxu0 0.0
    %106 = vmatprep.subr.mxu0 0.0
    %107 = vmatpush1.msra.mxu0 0.0
    %108 = vmatprep.subr.mxu0 0.0
    %109 = vmatpush1.msra.mxu0 0.0
    %110 = vmatprep.subr.mxu0 0.0
    %111 = vmatpush1.msra.mxu0 0.0
    %112 = vmatprep.subr.mxu0 0.0
    %113 = vmatpush1.msra.mxu0 0.0
    %114 = vmatprep.subr.mxu0 0.0
    %115 = vmatpush1.msra.mxu0 0.0
    %116 = vmatprep.subr.mxu0 0.0
    %117 = vmatpush1.msra.mxu0 0.0
    %118 = vmatprep.subr.mxu0 0.0
    %119 = vmatpush1.msra.mxu0 0.0
    %120 = vmatprep.subr.mxu0 0.0
    %121 = vmatpush1.msra.mxu0 0.0
    %122 = vmatprep.subr.mxu0 0.0
    %123 = vmatpush1.msra.mxu0 0.0
    %124 = vmatprep.subr.mxu0 0.0
    %125 = vmatpush1.msra.mxu0 0.0
    %126 = vmatprep.subr.mxu0 0.0
    %127 = vmatpush1.msra.mxu0 0.0
    %128 = vmatprep.subr.mxu0 0.0
    %129 = vmatpush1.msra.mxu0 0.0
    %130 = vmatprep.subr.mxu0 0.0
    %131 = vmatpush1.msra.mxu0 0.0
    %132 = vmatprep.subr.mxu0 0.0
    %133 = vmatpush1.msra.mxu0 0.0
    %134 = vmatprep.subr.mxu0 0.0
    %135 = vmatpush1.msra.mxu0 0.0
    %136 = vmatprep.subr.mxu0 0.0
    %137 = vmatpush1.msra.mxu0 0.0
    %138 = vmatprep.subr.mxu0 0.0
    %139 = vmatpush1.msra.mxu0 0.0
    %140 = vmatprep.subr.mxu0 0.0
    %141 = vmatpush1.msra.mxu0 0.0
    %142 = vmatprep.subr.mxu0 0.0
    %143 = vmatpush1.msra.mxu0 0.0
    %144 = vmatprep.subr.mxu0 0.0
    %145 = vmatpush1.msra.mxu0 0.0
    %146 = vmatprep.subr.mxu0 0.0
    %147 = vmatpush1.msra.mxu0 0.0
    %148 = vmatprep.subr.mxu0 0.0
    %149 = vmatpush1.msra.mxu0 0.0
    %150 = vmatprep.subr.mxu0 0.0
    %151 = vmatpush1.msra.mxu0 0.0
    %152 = vmatprep.subr.mxu0 0.0
    %153 = vmatpush1.msra.mxu0 0.0
    %154 = vmatprep.mubr.f32.mxu0 0.0
    %155 = vmatmul.mubr.f32.gmra.mrb[0].mxu0 %v67
    %v156 = vpop.f32.mrb[0].mxu0
    %v157 = vadd.f32 %v38, %v156
    %v158 = vpop.f32.mrb[0].mxu0
    %159 = vmatprep.mubr.f32.mxu0 0.0
    %160 = vmatmul.mubr.f32.gmra.mrb[0].mxu0 %v70
    %v161 = vpop.f32.mrb[0].mxu0
    %v162 = vadd.f32 %v38, %v161
    %v163 = vpop.f32.mrb[0].mxu0
    %164 = vmatprep.mubr.f32.mxu0 0.0
    %165 = vmatmul.mubr.f32.gmra.mrb[0].mxu0 %v73
    %v166 = vpop.f32.mrb[0].mxu0
    %v167 = vadd.f32 %v38, %v166
    %v168 = vpop.f32.mrb[0].mxu0
    %169 = vmatprep.mubr.f32.mxu0 0.0
    %170 = vmatmul.mubr.f32.gmra.mrb[0].mxu0 %v76
    %v171 = vpop.f32.mrb[0].mxu0
    %v172 = vadd.f32 %v38, %v171
    %v173 = vpop.f32.mrb[0].mxu0
    %174 = vmatprep.mubr.f32.mxu0 0.0
    %175 = vmatmul.mubr.f32.gmra.mrb[0].mxu0 %v79
    %v176 = vpop.f32.mrb[0].mxu0
    %v177 = vadd.f32 %v38, %v176
    %v178 = vpop.f32.mrb[0].mxu0
    %179 = vmatprep.mubr.f32.mxu0 0.0
    %180 = vmatmul.mubr.f32.gmra.mrb[0].mxu0 %v82
    %v181 = vpop.f32.mrb[0].mxu0
    %v182 = vadd.f32 %v38, %v181
    %v183 = vpop.f32.mrb[0].mxu0
    %184 = vmatprep.mubr.f32.mxu0 0.0
    %185 = vmatmul.mubr.f32.gmra.mrb[0].mxu0 %v85
    %v186 = vpop.f32.mrb[0].mxu0
    %v187 = vadd.f32 %v38, %v186
    %v188 = vpop.f32.mrb[0].mxu0
    %189 = vmatprep.mubr.f32.mxu0 0.0
    %190 = vmatmul.mubr.f32.gmra.mrb[0].mxu0 %v88
    %v191 = vpop.f32.mrb[0].mxu0
    %v192 = vadd.f32 %v38, %v191
    %v193 = vpop.f32.mrb[0].mxu0
    %194 = vdwg.mxu0
    %v195 = vld [vmem:[%s2] sm:$0xf]
    %vm196 = vcmask 1043456
    %v197 = vsel %vm196, %v195, 0.0
    %s198 = scalar_lea.vmem %s2, 4
    %v199 = vld [vmem:[%s198] sm:$0xf]
    %v200 = vsel %vm196, %v199, 0.0
    %v201 = vld [vmem:[%s3] sm:$0xf]
    %v202 = vsel %vm196, %v201, 0.0
    %s203 = scalar_lea.vmem %s3, 4
    %v204 = vld [vmem:[%s203] sm:$0xf]
    %v205 = vsel %vm196, %v204, 0.0
    %207 = vrot.lane.b32.xlu0 %v200, 32
    %v208 = vpop.permute.xlu0 %207
    %vm210 = vcmask 261120
    %v211 = vsel %vm210, %v197, %v208
    %vm212 = vcmask 523264
    %v214 = vsel %vm212, %v211, 0
    %216 = vmatprep.subr.mxu0 %v40
    %217 = vmatpush1.msra.mxu0 %v39
    %218 = vmatprep.subr.mxu0 %v42
    %219 = vmatpush1.msra.mxu0 %v41
    %220 = vmatprep.subr.mxu0 %v44
    %221 = vmatpush1.msra.mxu0 %v43
    %222 = vmatprep.subr.mxu0 %v46
    %223 = vmatpush1.msra.mxu0 %v45
    %224 = vmatprep.subr.mxu0 %v48
    %225 = vmatpush1.msra.mxu0 %v47
    %226 = vmatprep.subr.mxu0 %v50
    %227 = vmatpush1.msra.mxu0 %v49
    %228 = vmatprep.subr.mxu0 %v52
    %229 = vmatpush1.msra.mxu0 %v51
    %230 = vmatprep.subr.mxu0 %v54
    %231 = vmatpush1.msra.mxu0 %v53
    %232 = vmatprep.subr.mxu0 0.0
    %233 = vmatpush1.msra.mxu0 0.0
    %234 = vmatprep.subr.mxu0 0.0
    %235 = vmatpush1.msra.mxu0 0.0
    %236 = vmatprep.subr.mxu0 0.0
    %237 = vmatpush1.msra.mxu0 0.0
    %238 = vmatprep.subr.mxu0 0.0
    %239 = vmatpush1.msra.mxu0 0.0
    %240 = vmatprep.subr.mxu0 0.0
    %241 = vmatpush1.msra.mxu0 0.0
    %242 = vmatprep.subr.mxu0 0.0
    %243 = vmatpush1.msra.mxu0 0.0
    %244 = vmatprep.subr.mxu0 0.0
    %245 = vmatpush1.msra.mxu0 0.0
    %246 = vmatprep.subr.mxu0 0.0
    %247 = vmatpush1.msra.mxu0 0.0
    %248 = vmatprep.subr.mxu0 0.0
    %249 = vmatpush1.msra.mxu0 0.0
    %250 = vmatprep.subr.mxu0 0.0
    %251 = vmatpush1.msra.mxu0 0.0
    %252 = vmatprep.subr.mxu0 0.0
    %253 = vmatpush1.msra.mxu0 0.0
    %254 = vmatprep.subr.mxu0 0.0
    %255 = vmatpush1.msra.mxu0 0.0
    %256 = vmatprep.subr.mxu0 0.0
    %257 = vmatpush1.msra.mxu0 0.0
    %258 = vmatprep.subr.mxu0 0.0
    %259 = vmatpush1.msra.mxu0 0.0
    %260 = vmatprep.subr.mxu0 0.0
    %261 = vmatpush1.msra.mxu0 0.0
    %262 = vmatprep.subr.mxu0 0.0
    %263 = vmatpush1.msra.mxu0 0.0
    %264 = vmatprep.subr.mxu0 0.0
    %265 = vmatpush1.msra.mxu0 0.0
    %266 = vmatprep.subr.mxu0 0.0
    %267 = vmatpush1.msra.mxu0 0.0
    %268 = vmatprep.subr.mxu0 0.0
    %269 = vmatpush1.msra.mxu0 0.0
    %270 = vmatprep.subr.mxu0 0.0
    %271 = vmatpush1.msra.mxu0 0.0
    %272 = vmatprep.subr.mxu0 0.0
    %273 = vmatpush1.msra.mxu0 0.0
    %274 = vmatprep.subr.mxu0 0.0
    %275 = vmatpush1.msra.mxu0 0.0
    %276 = vmatprep.subr.mxu0 0.0
    %277 = vmatpush1.msra.mxu0 0.0
    %278 = vmatprep.subr.mxu0 0.0
    %279 = vmatpush1.msra.mxu0 0.0
    %280 = vmatprep.mubr.f32.mxu0 0.0
    %281 = vmatmul.mubr.f32.gmra.mrb[0].mxu0 %v214
    %v282 = vpop.f32.mrb[0].mxu0
    %v283 = vadd.f32 0.0, %v282
    %v284 = vpop.f32.mrb[0].mxu0
    %285 = vdwg.mxu0
    %v286 = vadd.f32 %v157, %v283
    %v287 = vxor.u32 %v286, 2147483648
    %v288 = vmul.f32 %v287, 1.442695
    %v289 = vpow.pop %v288
    %v290 = vadd.f32 %v289, 1.0
    %v291 = vrcp.pop %v290
    %v292 = vmul.f32 1.0, %v291
    %v293 = vtanh.pop %v286
    %295 = vrot.lane.b32.xlu0 %v202, 32
    %v296 = vpop.permute.xlu0 %295
    %v298 = vmul.f32 %v292, %v296
    %300 = vrot.lane.b32.xlu0 %v293, 64
    %v301 = vpop.permute.xlu0 %300
    %v303 = vmul.f32 %v292, %v301
    %305 = vrot.lane.b32.xlu0 %v303, 32
    %v306 = vpop.permute.xlu0 %305
    %v308 = vadd.f32 %v298, %v306
    %v309 = vtanh.pop %v308
    %311 = vrot.lane.b32.xlu0 %v309, 64
    %v312 = vpop.permute.xlu0 %311
    %v314 = vmul.f32 %v292, %v312
    %316 = vrot.lane.b32.xlu0 %v314, 32
    %v317 = vpop.permute.xlu0 %316
    %v319 = vsel %vm210, %v317, %v208
    %v321 = vsel %vm212, %v319, 0
    %323 = vmatprep.subr.mxu0 %v40
    %324 = vmatpush1.msra.mxu0 %v39
    %325 = vmatprep.subr.mxu0 %v42
    %326 = vmatpush1.msra.mxu0 %v41
    %327 = vmatprep.subr.mxu0 %v44
    %328 = vmatpush1.msra.mxu0 %v43
    %329 = vmatprep.subr.mxu0 %v46
    %330 = vmatpush1.msra.mxu0 %v45
    %331 = vmatprep.subr.mxu0 %v48
    %332 = vmatpush1.msra.mxu0 %v47
    %333 = vmatprep.subr.mxu0 %v50
    %334 = vmatpush1.msra.mxu0 %v49
    %335 = vmatprep.subr.mxu0 %v52
    %336 = vmatpush1.msra.mxu0 %v51
    %337 = vmatprep.subr.mxu0 %v54
    %338 = vmatpush1.msra.mxu0 %v53
    %339 = vmatprep.subr.mxu0 0.0
    %340 = vmatpush1.msra.mxu0 0.0
    %341 = vmatprep.subr.mxu0 0.0
    %342 = vmatpush1.msra.mxu0 0.0
    %343 = vmatprep.subr.mxu0 0.0
    %344 = vmatpush1.msra.mxu0 0.0
    %345 = vmatprep.subr.mxu0 0.0
    %346 = vmatpush1.msra.mxu0 0.0
    %347 = vmatprep.subr.mxu0 0.0
    %348 = vmatpush1.msra.mxu0 0.0
    %349 = vmatprep.subr.mxu0 0.0
    %350 = vmatpush1.msra.mxu0 0.0
    %351 = vmatprep.subr.mxu0 0.0
    %352 = vmatpush1.msra.mxu0 0.0
    %353 = vmatprep.subr.mxu0 0.0
    %354 = vmatpush1.msra.mxu0 0.0
    %355 = vmatprep.subr.mxu0 0.0
    %356 = vmatpush1.msra.mxu0 0.0
    %357 = vmatprep.subr.mxu0 0.0
    %358 = vmatpush1.msra.mxu0 0.0
    %359 = vmatprep.subr.mxu0 0.0
    %360 = vmatpush1.msra.mxu0 0.0
    %361 = vmatprep.subr.mxu0 0.0
    %362 = vmatpush1.msra.mxu0 0.0
    %363 = vmatprep.subr.mxu0 0.0
    %364 = vmatpush1.msra.mxu0 0.0
    %365 = vmatprep.subr.mxu0 0.0
    %366 = vmatpush1.msra.mxu0 0.0
    %367 = vmatprep.subr.mxu0 0.0
    %368 = vmatpush1.msra.mxu0 0.0
    %369 = vmatprep.subr.mxu0 0.0
    %370 = vmatpush1.msra.mxu0 0.0
    %371 = vmatprep.subr.mxu0 0.0
    %372 = vmatpush1.msra.mxu0 0.0
    %373 = vmatprep.subr.mxu0 0.0
    %374 = vmatpush1.msra.mxu0 0.0
    %375 = vmatprep.subr.mxu0 0.0
    %376 = vmatpush1.msra.mxu0 0.0
    %377 = vmatprep.subr.mxu0 0.0
    %378 = vmatpush1.msra.mxu0 0.0
    %379 = vmatprep.subr.mxu0 0.0
    %380 = vmatpush1.msra.mxu0 0.0
    %381 = vmatprep.subr.mxu0 0.0
    %382 = vmatpush1.msra.mxu0 0.0
    %383 = vmatprep.subr.mxu0 0.0
    %384 = vmatpush1.msra.mxu0 0.0
    %385 = vmatprep.subr.mxu0 0.0
    %386 = vmatpush1.msra.mxu0 0.0
    %387 = vmatprep.mubr.f32.mxu0 0.0
    %388 = vmatmul.mubr.f32.gmra.mrb[0].mxu0 %v321
    %v389 = vpop.f32.mrb[0].mxu0
    %v390 = vadd.f32 0.0, %v389
    %v391 = vpop.f32.mrb[0].mxu0
    %v392 = vadd.f32 0.0, %v391
    %393 = vdwg.mxu0
    %v394 = vadd.f32 %v162, %v390
    %v395 = vxor.u32 %v394, 2147483648
    %v396 = vmul.f32 %v395, 1.442695
    %v397 = vpow.pop %v396
    %v398 = vadd.f32 %v397, 1.0
    %v399 = vrcp.pop %v398
    %v400 = vmul.f32 1.0, %v399
    %v401 = vtanh.pop %v394
    %v402 = vmul.f32 %v400, %v308
    %404 = vrot.lane.b32.xlu0 %v401, 64
    %v405 = vpop.permute.xlu0 %404
    %v407 = vmul.f32 %v400, %v405
    %409 = vrot.lane.b32.xlu0 %v407, 32
    %v410 = vpop.permute.xlu0 %409
    %v412 = vadd.f32 %v402, %v410
    %v413 = vtanh.pop %v412
    %415 = vrot.lane.b32.xlu0 %v413, 64
    %v416 = vpop.permute.xlu0 %415
    %v418 = vmul.f32 %v400, %v416
    %v419 = vadd.f32 %v392, %v56
    %v420 = vxor.u32 %v419, 2147483648
    %v421 = vmul.f32 %v420, 1.442695
    %v422 = vpow.pop %v421
    %v423 = vadd.f32 %v422, 1.0
    %v424 = vrcp.pop %v423
    %v425 = vmul.f32 1.0, %v424
    %v426 = vtanh.pop %v419
    %428 = vrot.lane.b32.xlu0 %v205, 32
    %v429 = vpop.permute.xlu0 %428
    %v431 = vmul.f32 %v425, %v429
    %433 = vrot.lane.b32.xlu0 %v426, 64
    %v434 = vpop.permute.xlu0 %433
    %v436 = vmul.f32 %v425, %v434
    %438 = vrot.lane.b32.xlu0 %v436, 32
    %v439 = vpop.permute.xlu0 %438
    %v441 = vadd.f32 %v431, %v439
    %v442 = vtanh.pop %v441
    %444 = vrot.lane.b32.xlu0 %v442, 64
    %v445 = vpop.permute.xlu0 %444
    %v447 = vmul.f32 %v425, %v445
    %449 = vrot.lane.b32.xlu0 %v418, 32
    %v450 = vpop.permute.xlu0 %449
    %453 = vrot.lane.b32.xlu0 %v447, 64
    %v454 = vpop.permute.xlu0 %453
    %v456 = vsel %vm210, %v450, %v454
    %v458 = vsel %vm212, %v456, 0
    %460 = vmatprep.subr.mxu0 %v40
    %461 = vmatpush1.msra.mxu0 %v39
    %462 = vmatprep.subr.mxu0 %v42
    %463 = vmatpush1.msra.mxu0 %v41
    %464 = vmatprep.subr.mxu0 %v44
    %465 = vmatpush1.msra.mxu0 %v43
    %466 = vmatprep.subr.mxu0 %v46
    %467 = vmatpush1.msra.mxu0 %v45
    %468 = vmatprep.subr.mxu0 %v48
    %469 = vmatpush1.msra.mxu0 %v47
    %470 = vmatprep.subr.mxu0 %v50
    %471 = vmatpush1.msra.mxu0 %v49
    %472 = vmatprep.subr.mxu0 %v52
    %473 = vmatpush1.msra.mxu0 %v51
    %474 = vmatprep.subr.mxu0 %v54
    %475 = vmatpush1.msra.mxu0 %v53
    %476 = vmatprep.subr.mxu0 0.0
    %477 = vmatpush1.msra.mxu0 0.0
    %478 = vmatprep.subr.mxu0 0.0
    %479 = vmatpush1.msra.mxu0 0.0
    %480 = vmatprep.subr.mxu0 0.0
    %481 = vmatpush1.msra.mxu0 0.0
    %482 = vmatprep.subr.mxu0 0.0
    %483 = vmatpush1.msra.mxu0 0.0
    %484 = vmatprep.subr.mxu0 0.0
    %485 = vmatpush1.msra.mxu0 0.0
    %486 = vmatprep.subr.mxu0 0.0
    %487 = vmatpush1.msra.mxu0 0.0
    %488 = vmatprep.subr.mxu0 0.0
    %489 = vmatpush1.msra.mxu0 0.0
    %490 = vmatprep.subr.mxu0 0.0
    %491 = vmatpush1.msra.mxu0 0.0
    %492 = vmatprep.subr.mxu0 0.0
    %493 = vmatpush1.msra.mxu0 0.0
    %494 = vmatprep.subr.mxu0 0.0
    %495 = vmatpush1.msra.mxu0 0.0
    %496 = vmatprep.subr.mxu0 0.0
    %497 = vmatpush1.msra.mxu0 0.0
    %498 = vmatprep.subr.mxu0 0.0
    %499 = vmatpush1.msra.mxu0 0.0
    %500 = vmatprep.subr.mxu0 0.0
    %501 = vmatpush1.msra.mxu0 0.0
    %502 = vmatprep.subr.mxu0 0.0
    %503 = vmatpush1.msra.mxu0 0.0
    %504 = vmatprep.subr.mxu0 0.0
    %505 = vmatpush1.msra.mxu0 0.0
    %506 = vmatprep.subr.mxu0 0.0
    %507 = vmatpush1.msra.mxu0 0.0
    %508 = vmatprep.subr.mxu0 0.0
    %509 = vmatpush1.msra.mxu0 0.0
    %510 = vmatprep.subr.mxu0 0.0
    %511 = vmatpush1.msra.mxu0 0.0
    %512 = vmatprep.subr.mxu0 0.0
    %513 = vmatpush1.msra.mxu0 0.0
    %514 = vmatprep.subr.mxu0 0.0
    %515 = vmatpush1.msra.mxu0 0.0
    %516 = vmatprep.subr.mxu0 0.0
    %517 = vmatpush1.msra.mxu0 0.0
    %518 = vmatprep.subr.mxu0 0.0
    %519 = vmatpush1.msra.mxu0 0.0
    %520 = vmatprep.subr.mxu0 0.0
    %521 = vmatpush1.msra.mxu0 0.0
    %522 = vmatprep.subr.mxu0 0.0
    %523 = vmatpush1.msra.mxu0 0.0
    %524 = vmatprep.mubr.f32.mxu0 0.0
    %525 = vmatmul.mubr.f32.gmra.mrb[0].mxu0 %v458
    %v526 = vpop.f32.mrb[0].mxu0
    %v527 = vadd.f32 0.0, %v526
    %v528 = vpop.f32.mrb[0].mxu0
    %v529 = vadd.f32 0.0, %v528
    %530 = vdwg.mxu0
    %v531 = vadd.f32 %v167, %v527
    %v532 = vxor.u32 %v531, 2147483648
    %v533 = vmul.f32 %v532, 1.442695
    %v534 = vpow.pop %v533
    %v535 = vadd.f32 %v534, 1.0
    %v536 = vrcp.pop %v535
    %v537 = vmul.f32 1.0, %v536
    %v538 = vtanh.pop %v531
    %v539 = vmul.f32 %v537, %v412
    %541 = vrot.lane.b32.xlu0 %v538, 64
    %v542 = vpop.permute.xlu0 %541
    %v544 = vmul.f32 %v537, %v542
    %546 = vrot.lane.b32.xlu0 %v544, 32
    %v547 = vpop.permute.xlu0 %546
    %v549 = vadd.f32 %v539, %v547
    %v550 = vtanh.pop %v549
    %552 = vrot.lane.b32.xlu0 %v550, 64
    %v553 = vpop.permute.xlu0 %552
    %v555 = vmul.f32 %v537, %v553
    %v556 = vadd.f32 %v529, %v56
    %v557 = vxor.u32 %v556, 2147483648
    %v558 = vmul.f32 %v557, 1.442695
    %v559 = vpow.pop %v558
    %v560 = vadd.f32 %v559, 1.0
    %v561 = vrcp.pop %v560
    %v562 = vmul.f32 1.0, %v561
    %v563 = vtanh.pop %v556
    %v564 = vmul.f32 %v562, %v441
    %566 = vrot.lane.b32.xlu0 %v563, 64
    %v567 = vpop.permute.xlu0 %566
    %v569 = vmul.f32 %v562, %v567
    %571 = vrot.lane.b32.xlu0 %v569, 32
    %v572 = vpop.permute.xlu0 %571
    %v574 = vadd.f32 %v564, %v572
    %v575 = vtanh.pop %v574
    %577 = vrot.lane.b32.xlu0 %v575, 64
    %v578 = vpop.permute.xlu0 %577
    %v580 = vmul.f32 %v562, %v578
    %582 = vrot.lane.b32.xlu0 %v555, 32
    %v583 = vpop.permute.xlu0 %582
    %586 = vrot.lane.b32.xlu0 %v580, 64
    %v587 = vpop.permute.xlu0 %586
    %v589 = vsel %vm210, %v583, %v587
    %v591 = vsel %vm212, %v589, 0
    %593 = vmatprep.subr.mxu0 %v40
    %594 = vmatpush1.msra.mxu0 %v39
    %595 = vmatprep.subr.mxu0 %v42
    %596 = vmatpush1.msra.mxu0 %v41
    %597 = vmatprep.subr.mxu0 %v44
    %598 = vmatpush1.msra.mxu0 %v43
    %599 = vmatprep.subr.mxu0 %v46
    %600 = vmatpush1.msra.mxu0 %v45
    %601 = vmatprep.subr.mxu0 %v48
    %602 = vmatpush1.msra.mxu0 %v47
    %603 = vmatprep.subr.mxu0 %v50
    %604 = vmatpush1.msra.mxu0 %v49
    %605 = vmatprep.subr.mxu0 %v52
    %606 = vmatpush1.msra.mxu0 %v51
    %607 = vmatprep.subr.mxu0 %v54
    %608 = vmatpush1.msra.mxu0 %v53
    %609 = vmatprep.subr.mxu0 0.0
    %610 = vmatpush1.msra.mxu0 0.0
    %611 = vmatprep.subr.mxu0 0.0
    %612 = vmatpush1.msra.mxu0 0.0
    %613 = vmatprep.subr.mxu0 0.0
    %614 = vmatpush1.msra.mxu0 0.0
    %615 = vmatprep.subr.mxu0 0.0
    %616 = vmatpush1.msra.mxu0 0.0
    %617 = vmatprep.subr.mxu0 0.0
    %618 = vmatpush1.msra.mxu0 0.0
    %619 = vmatprep.subr.mxu0 0.0
    %620 = vmatpush1.msra.mxu0 0.0
    %621 = vmatprep.subr.mxu0 0.0
    %622 = vmatpush1.msra.mxu0 0.0
    %623 = vmatprep.subr.mxu0 0.0
    %624 = vmatpush1.msra.mxu0 0.0
    %625 = vmatprep.subr.mxu0 0.0
    %626 = vmatpush1.msra.mxu0 0.0
    %627 = vmatprep.subr.mxu0 0.0
    %628 = vmatpush1.msra.mxu0 0.0
    %629 = vmatprep.subr.mxu0 0.0
    %630 = vmatpush1.msra.mxu0 0.0
    %631 = vmatprep.subr.mxu0 0.0
    %632 = vmatpush1.msra.mxu0 0.0
    %633 = vmatprep.subr.mxu0 0.0
    %634 = vmatpush1.msra.mxu0 0.0
    %635 = vmatprep.subr.mxu0 0.0
    %636 = vmatpush1.msra.mxu0 0.0
    %637 = vmatprep.subr.mxu0 0.0
    %638 = vmatpush1.msra.mxu0 0.0
    %639 = vmatprep.subr.mxu0 0.0
    %640 = vmatpush1.msra.mxu0 0.0
    %641 = vmatprep.subr.mxu0 0.0
    %642 = vmatpush1.msra.mxu0 0.0
    %643 = vmatprep.subr.mxu0 0.0
    %644 = vmatpush1.msra.mxu0 0.0
    %645 = vmatprep.subr.mxu0 0.0
    %646 = vmatpush1.msra.mxu0 0.0
    %647 = vmatprep.subr.mxu0 0.0
    %648 = vmatpush1.msra.mxu0 0.0
    %649 = vmatprep.subr.mxu0 0.0
    %650 = vmatpush1.msra.mxu0 0.0
    %651 = vmatprep.subr.mxu0 0.0
    %652 = vmatpush1.msra.mxu0 0.0
    %653 = vmatprep.subr.mxu0 0.0
    %654 = vmatpush1.msra.mxu0 0.0
    %655 = vmatprep.subr.mxu0 0.0
    %656 = vmatpush1.msra.mxu0 0.0
    %657 = vmatprep.mubr.f32.mxu0 0.0
    %658 = vmatmul.mubr.f32.gmra.mrb[0].mxu0 %v591
    %v659 = vpop.f32.mrb[0].mxu0
    %v660 = vadd.f32 0.0, %v659
    %v661 = vpop.f32.mrb[0].mxu0
    %v662 = vadd.f32 0.0, %v661
    %663 = vdwg.mxu0
    %v664 = vadd.f32 %v172, %v660
    %v665 = vxor.u32 %v664, 2147483648
    %v666 = vmul.f32 %v665, 1.442695
    %v667 = vpow.pop %v666
    %v668 = vadd.f32 %v667, 1.0
    %v669 = vrcp.pop %v668
    %v670 = vmul.f32 1.0, %v669
    %v671 = vtanh.pop %v664
    %v672 = vmul.f32 %v670, %v549
    %674 = vrot.lane.b32.xlu0 %v671, 64
    %v675 = vpop.permute.xlu0 %674
    %v677 = vmul.f32 %v670, %v675
    %679 = vrot.lane.b32.xlu0 %v677, 32
    %v680 = vpop.permute.xlu0 %679
    %v682 = vadd.f32 %v672, %v680
    %v683 = vtanh.pop %v682
    %685 = vrot.lane.b32.xlu0 %v683, 64
    %v686 = vpop.permute.xlu0 %685
    %v688 = vmul.f32 %v670, %v686
    %v689 = vadd.f32 %v662, %v56
    %v690 = vxor.u32 %v689, 2147483648
    %v691 = vmul.f32 %v690, 1.442695
    %v692 = vpow.pop %v691
    %v693 = vadd.f32 %v692, 1.0
    %v694 = vrcp.pop %v693
    %v695 = vmul.f32 1.0, %v694
    %v696 = vtanh.pop %v689
    %v697 = vmul.f32 %v695, %v574
    %699 = vrot.lane.b32.xlu0 %v696, 64
    %v700 = vpop.permute.xlu0 %699
    %v702 = vmul.f32 %v695, %v700
    %704 = vrot.lane.b32.xlu0 %v702, 32
    %v705 = vpop.permute.xlu0 %704
    %v707 = vadd.f32 %v697, %v705
    %v708 = vtanh.pop %v707
    %710 = vrot.lane.b32.xlu0 %v708, 64
    %v711 = vpop.permute.xlu0 %710
    %v713 = vmul.f32 %v695, %v711
    %715 = vrot.lane.b32.xlu0 %v688, 32
    %v716 = vpop.permute.xlu0 %715
    %719 = vrot.lane.b32.xlu0 %v713, 64
    %v720 = vpop.permute.xlu0 %719
    %v722 = vsel %vm210, %v716, %v720
    %v724 = vsel %vm212, %v722, 0
    %726 = vmatprep.subr.mxu0 %v40
    %727 = vmatpush1.msra.mxu0 %v39
    %728 = vmatprep.subr.mxu0 %v42
    %729 = vmatpush1.msra.mxu0 %v41
    %730 = vmatprep.subr.mxu0 %v44
    %731 = vmatpush1.msra.mxu0 %v43
    %732 = vmatprep.subr.mxu0 %v46
    %733 = vmatpush1.msra.mxu0 %v45
    %734 = vmatprep.subr.mxu0 %v48
    %735 = vmatpush1.msra.mxu0 %v47
    %736 = vmatprep.subr.mxu0 %v50
    %737 = vmatpush1.msra.mxu0 %v49
    %738 = vmatprep.subr.mxu0 %v52
    %739 = vmatpush1.msra.mxu0 %v51
    %740 = vmatprep.subr.mxu0 %v54
    %741 = vmatpush1.msra.mxu0 %v53
    %742 = vmatprep.subr.mxu0 0.0
    %743 = vmatpush1.msra.mxu0 0.0
    %744 = vmatprep.subr.mxu0 0.0
    %745 = vmatpush1.msra.mxu0 0.0
    %746 = vmatprep.subr.mxu0 0.0
    %747 = vmatpush1.msra.mxu0 0.0
    %748 = vmatprep.subr.mxu0 0.0
    %749 = vmatpush1.msra.mxu0 0.0
    %750 = vmatprep.subr.mxu0 0.0
    %751 = vmatpush1.msra.mxu0 0.0
    %752 = vmatprep.subr.mxu0 0.0
    %753 = vmatpush1.msra.mxu0 0.0
    %754 = vmatprep.subr.mxu0 0.0
    %755 = vmatpush1.msra.mxu0 0.0
    %756 = vmatprep.subr.mxu0 0.0
    %757 = vmatpush1.msra.mxu0 0.0
    %758 = vmatprep.subr.mxu0 0.0
    %759 = vmatpush1.msra.mxu0 0.0
    %760 = vmatprep.subr.mxu0 0.0
    %761 = vmatpush1.msra.mxu0 0.0
    %762 = vmatprep.subr.mxu0 0.0
    %763 = vmatpush1.msra.mxu0 0.0
    %764 = vmatprep.subr.mxu0 0.0
    %765 = vmatpush1.msra.mxu0 0.0
    %766 = vmatprep.subr.mxu0 0.0
    %767 = vmatpush1.msra.mxu0 0.0
    %768 = vmatprep.subr.mxu0 0.0
    %769 = vmatpush1.msra.mxu0 0.0
    %770 = vmatprep.subr.mxu0 0.0
    %771 = vmatpush1.msra.mxu0 0.0
    %772 = vmatprep.subr.mxu0 0.0
    %773 = vmatpush1.msra.mxu0 0.0
    %774 = vmatprep.subr.mxu0 0.0
    %775 = vmatpush1.msra.mxu0 0.0
    %776 = vmatprep.subr.mxu0 0.0
    %777 = vmatpush1.msra.mxu0 0.0
    %778 = vmatprep.subr.mxu0 0.0
    %779 = vmatpush1.msra.mxu0 0.0
    %780 = vmatprep.subr.mxu0 0.0
    %781 = vmatpush1.msra.mxu0 0.0
    %782 = vmatprep.subr.mxu0 0.0
    %783 = vmatpush1.msra.mxu0 0.0
    %784 = vmatprep.subr.mxu0 0.0
    %785 = vmatpush1.msra.mxu0 0.0
    %786 = vmatprep.subr.mxu0 0.0
    %787 = vmatpush1.msra.mxu0 0.0
    %788 = vmatprep.subr.mxu0 0.0
    %789 = vmatpush1.msra.mxu0 0.0
    %790 = vmatprep.mubr.f32.mxu0 0.0
    %791 = vmatmul.mubr.f32.gmra.mrb[0].mxu0 %v724
    %v792 = vpop.f32.mrb[0].mxu0
    %v793 = vadd.f32 0.0, %v792
    %v794 = vpop.f32.mrb[0].mxu0
    %v795 = vadd.f32 0.0, %v794
    %796 = vdwg.mxu0
    %v797 = vadd.f32 %v177, %v793
    %v798 = vxor.u32 %v797, 2147483648
    %v799 = vmul.f32 %v798, 1.442695
    %v800 = vpow.pop %v799
    %v801 = vadd.f32 %v800, 1.0
    %v802 = vrcp.pop %v801
    %v803 = vmul.f32 1.0, %v802
    %v804 = vtanh.pop %v797
    %v805 = vmul.f32 %v803, %v682
    %807 = vrot.lane.b32.xlu0 %v804, 64
    %v808 = vpop.permute.xlu0 %807
    %v810 = vmul.f32 %v803, %v808
    %812 = vrot.lane.b32.xlu0 %v810, 32
    %v813 = vpop.permute.xlu0 %812
    %v815 = vadd.f32 %v805, %v813
    %v816 = vtanh.pop %v815
    %818 = vrot.lane.b32.xlu0 %v816, 64
    %v819 = vpop.permute.xlu0 %818
    %v821 = vmul.f32 %v803, %v819
    %v822 = vadd.f32 %v795, %v56
    %v823 = vxor.u32 %v822, 2147483648
    %v824 = vmul.f32 %v823, 1.442695
    %v825 = vpow.pop %v824
    %v826 = vadd.f32 %v825, 1.0
    %v827 = vrcp.pop %v826
    %v828 = vmul.f32 1.0, %v827
    %v829 = vtanh.pop %v822
    %v830 = vmul.f32 %v828, %v707
    %832 = vrot.lane.b32.xlu0 %v829, 64
    %v833 = vpop.permute.xlu0 %832
    %v835 = vmul.f32 %v828, %v833
    %837 = vrot.lane.b32.xlu0 %v835, 32
    %v838 = vpop.permute.xlu0 %837
    %v840 = vadd.f32 %v830, %v838
    %v841 = vtanh.pop %v840
    %843 = vrot.lane.b32.xlu0 %v841, 64
    %v844 = vpop.permute.xlu0 %843
    %v846 = vmul.f32 %v828, %v844
    %848 = vrot.lane.b32.xlu0 %v821, 32
    %v849 = vpop.permute.xlu0 %848
    %852 = vrot.lane.b32.xlu0 %v846, 64
    %v853 = vpop.permute.xlu0 %852
    %v855 = vsel %vm210, %v849, %v853
    %v857 = vsel %vm212, %v855, 0
    %859 = vmatprep.subr.mxu0 %v40
    %860 = vmatpush1.msra.mxu0 %v39
    %861 = vmatprep.subr.mxu0 %v42
    %862 = vmatpush1.msra.mxu0 %v41
    %863 = vmatprep.subr.mxu0 %v44
    %864 = vmatpush1.msra.mxu0 %v43
    %865 = vmatprep.subr.mxu0 %v46
    %866 = vmatpush1.msra.mxu0 %v45
    %867 = vmatprep.subr.mxu0 %v48
    %868 = vmatpush1.msra.mxu0 %v47
    %869 = vmatprep.subr.mxu0 %v50
    %870 = vmatpush1.msra.mxu0 %v49
    %871 = vmatprep.subr.mxu0 %v52
    %872 = vmatpush1.msra.mxu0 %v51
    %873 = vmatprep.subr.mxu0 %v54
    %874 = vmatpush1.msra.mxu0 %v53
    %875 = vmatprep.subr.mxu0 0.0
    %876 = vmatpush1.msra.mxu0 0.0
    %877 = vmatprep.subr.mxu0 0.0
    %878 = vmatpush1.msra.mxu0 0.0
    %879 = vmatprep.subr.mxu0 0.0
    %880 = vmatpush1.msra.mxu0 0.0
    %881 = vmatprep.subr.mxu0 0.0
    %882 = vmatpush1.msra.mxu0 0.0
    %883 = vmatprep.subr.mxu0 0.0
    %884 = vmatpush1.msra.mxu0 0.0
    %885 = vmatprep.subr.mxu0 0.0
    %886 = vmatpush1.msra.mxu0 0.0
    %887 = vmatprep.subr.mxu0 0.0
    %888 = vmatpush1.msra.mxu0 0.0
    %889 = vmatprep.subr.mxu0 0.0
    %890 = vmatpush1.msra.mxu0 0.0
    %891 = vmatprep.subr.mxu0 0.0
    %892 = vmatpush1.msra.mxu0 0.0
    %893 = vmatprep.subr.mxu0 0.0
    %894 = vmatpush1.msra.mxu0 0.0
    %895 = vmatprep.subr.mxu0 0.0
    %896 = vmatpush1.msra.mxu0 0.0
    %897 = vmatprep.subr.mxu0 0.0
    %898 = vmatpush1.msra.mxu0 0.0
    %899 = vmatprep.subr.mxu0 0.0
    %900 = vmatpush1.msra.mxu0 0.0
    %901 = vmatprep.subr.mxu0 0.0
    %902 = vmatpush1.msra.mxu0 0.0
    %903 = vmatprep.subr.mxu0 0.0
    %904 = vmatpush1.msra.mxu0 0.0
    %905 = vmatprep.subr.mxu0 0.0
    %906 = vmatpush1.msra.mxu0 0.0
    %907 = vmatprep.subr.mxu0 0.0
    %908 = vmatpush1.msra.mxu0 0.0
    %909 = vmatprep.subr.mxu0 0.0
    %910 = vmatpush1.msra.mxu0 0.0
    %911 = vmatprep.subr.mxu0 0.0
    %912 = vmatpush1.msra.mxu0 0.0
    %913 = vmatprep.subr.mxu0 0.0
    %914 = vmatpush1.msra.mxu0 0.0
    %915 = vmatprep.subr.mxu0 0.0
    %916 = vmatpush1.msra.mxu0 0.0
    %917 = vmatprep.subr.mxu0 0.0
    %918 = vmatpush1.msra.mxu0 0.0
    %919 = vmatprep.subr.mxu0 0.0
    %920 = vmatpush1.msra.mxu0 0.0
    %921 = vmatprep.subr.mxu0 0.0
    %922 = vmatpush1.msra.mxu0 0.0
    %923 = vmatprep.mubr.f32.mxu0 0.0
    %924 = vmatmul.mubr.f32.gmra.mrb[0].mxu0 %v857
    %v925 = vpop.f32.mrb[0].mxu0
    %v926 = vadd.f32 0.0, %v925
    %v927 = vpop.f32.mrb[0].mxu0
    %v928 = vadd.f32 0.0, %v927
    %929 = vdwg.mxu0
    %v930 = vadd.f32 %v182, %v926
    %v931 = vxor.u32 %v930, 2147483648
    %v932 = vmul.f32 %v931, 1.442695
    %v933 = vpow.pop %v932
    %v934 = vadd.f32 %v933, 1.0
    %v935 = vrcp.pop %v934
    %v936 = vmul.f32 1.0, %v935
    %v937 = vtanh.pop %v930
    %v938 = vmul.f32 %v936, %v815
    %940 = vrot.lane.b32.xlu0 %v937, 64
    %v941 = vpop.permute.xlu0 %940
    %v943 = vmul.f32 %v936, %v941
    %945 = vrot.lane.b32.xlu0 %v943, 32
    %v946 = vpop.permute.xlu0 %945
    %v948 = vadd.f32 %v938, %v946
    %v949 = vtanh.pop %v948
    %951 = vrot.lane.b32.xlu0 %v949, 64
    %v952 = vpop.permute.xlu0 %951
    %v954 = vmul.f32 %v936, %v952
    %v955 = vadd.f32 %v928, %v56
    %v956 = vxor.u32 %v955, 2147483648
    %v957 = vmul.f32 %v956, 1.442695
    %v958 = vpow.pop %v957
    %v959 = vadd.f32 %v958, 1.0
    %v960 = vrcp.pop %v959
    %v961 = vmul.f32 1.0, %v960
    %v962 = vtanh.pop %v955
    %v963 = vmul.f32 %v961, %v840
    %965 = vrot.lane.b32.xlu0 %v962, 64
    %v966 = vpop.permute.xlu0 %965
    %v968 = vmul.f32 %v961, %v966
    %970 = vrot.lane.b32.xlu0 %v968, 32
    %v971 = vpop.permute.xlu0 %970
    %v973 = vadd.f32 %v963, %v971
    %v974 = vtanh.pop %v973
    %976 = vrot.lane.b32.xlu0 %v974, 64
    %v977 = vpop.permute.xlu0 %976
    %v979 = vmul.f32 %v961, %v977
    %981 = vrot.lane.b32.xlu0 %v954, 32
    %v982 = vpop.permute.xlu0 %981
    %985 = vrot.lane.b32.xlu0 %v979, 64
    %v986 = vpop.permute.xlu0 %985
    %v988 = vsel %vm210, %v982, %v986
    %v990 = vsel %vm212, %v988, 0
    %992 = vmatprep.subr.mxu0 %v40
    %993 = vmatpush1.msra.mxu0 %v39
    %994 = vmatprep.subr.mxu0 %v42
    %995 = vmatpush1.msra.mxu0 %v41
    %996 = vmatprep.subr.mxu0 %v44
    %997 = vmatpush1.msra.mxu0 %v43
    %998 = vmatprep.subr.mxu0 %v46
    %999 = vmatpush1.msra.mxu0 %v45
    %1000 = vmatprep.subr.mxu0 %v48
    %1001 = vmatpush1.msra.mxu0 %v47
    %1002 = vmatprep.subr.mxu0 %v50
    %1003 = vmatpush1.msra.mxu0 %v49
    %1004 = vmatprep.subr.mxu0 %v52
    %1005 = vmatpush1.msra.mxu0 %v51
    %1006 = vmatprep.subr.mxu0 %v54
    %1007 = vmatpush1.msra.mxu0 %v53
    %1008 = vmatprep.subr.mxu0 0.0
    %1009 = vmatpush1.msra.mxu0 0.0
    %1010 = vmatprep.subr.mxu0 0.0
    %1011 = vmatpush1.msra.mxu0 0.0
    %1012 = vmatprep.subr.mxu0 0.0
    %1013 = vmatpush1.msra.mxu0 0.0
    %1014 = vmatprep.subr.mxu0 0.0
    %1015 = vmatpush1.msra.mxu0 0.0
    %1016 = vmatprep.subr.mxu0 0.0
    %1017 = vmatpush1.msra.mxu0 0.0
    %1018 = vmatprep.subr.mxu0 0.0
    %1019 = vmatpush1.msra.mxu0 0.0
    %1020 = vmatprep.subr.mxu0 0.0
    %1021 = vmatpush1.msra.mxu0 0.0
    %1022 = vmatprep.subr.mxu0 0.0
    %1023 = vmatpush1.msra.mxu0 0.0
    %1024 = vmatprep.subr.mxu0 0.0
    %1025 = vmatpush1.msra.mxu0 0.0
    %1026 = vmatprep.subr.mxu0 0.0
    %1027 = vmatpush1.msra.mxu0 0.0
    %1028 = vmatprep.subr.mxu0 0.0
    %1029 = vmatpush1.msra.mxu0 0.0
    %1030 = vmatprep.subr.mxu0 0.0
    %1031 = vmatpush1.msra.mxu0 0.0
    %1032 = vmatprep.subr.mxu0 0.0
    %1033 = vmatpush1.msra.mxu0 0.0
    %1034 = vmatprep.subr.mxu0 0.0
    %1035 = vmatpush1.msra.mxu0 0.0
    %1036 = vmatprep.subr.mxu0 0.0
    %1037 = vmatpush1.msra.mxu0 0.0
    %1038 = vmatprep.subr.mxu0 0.0
    %1039 = vmatpush1.msra.mxu0 0.0
    %1040 = vmatprep.subr.mxu0 0.0
    %1041 = vmatpush1.msra.mxu0 0.0
    %1042 = vmatprep.subr.mxu0 0.0
    %1043 = vmatpush1.msra.mxu0 0.0
    %1044 = vmatprep.subr.mxu0 0.0
    %1045 = vmatpush1.msra.mxu0 0.0
    %1046 = vmatprep.subr.mxu0 0.0
    %1047 = vmatpush1.msra.mxu0 0.0
    %1048 = vmatprep.subr.mxu0 0.0
    %1049 = vmatpush1.msra.mxu0 0.0
    %1050 = vmatprep.subr.mxu0 0.0
    %1051 = vmatpush1.msra.mxu0 0.0
    %1052 = vmatprep.subr.mxu0 0.0
    %1053 = vmatpush1.msra.mxu0 0.0
    %1054 = vmatprep.subr.mxu0 0.0
    %1055 = vmatpush1.msra.mxu0 0.0
    %1056 = vmatprep.mubr.f32.mxu0 0.0
    %1057 = vmatmul.mubr.f32.gmra.mrb[0].mxu0 %v990
    %v1058 = vpop.f32.mrb[0].mxu0
    %v1059 = vadd.f32 0.0, %v1058
    %v1060 = vpop.f32.mrb[0].mxu0
    %v1061 = vadd.f32 0.0, %v1060
    %1062 = vdwg.mxu0
    %v1063 = vadd.f32 %v187, %v1059
    %v1064 = vxor.u32 %v1063, 2147483648
    %v1065 = vmul.f32 %v1064, 1.442695
    %v1066 = vpow.pop %v1065
    %v1067 = vadd.f32 %v1066, 1.0
    %v1068 = vrcp.pop %v1067
    %v1069 = vmul.f32 1.0, %v1068
    %v1070 = vtanh.pop %v1063
    %v1071 = vmul.f32 %v1069, %v948
    %1073 = vrot.lane.b32.xlu0 %v1070, 64
    %v1074 = vpop.permute.xlu0 %1073
    %v1076 = vmul.f32 %v1069, %v1074
    %1078 = vrot.lane.b32.xlu0 %v1076, 32
    %v1079 = vpop.permute.xlu0 %1078
    %v1081 = vadd.f32 %v1071, %v1079
    %v1082 = vtanh.pop %v1081
    %1084 = vrot.lane.b32.xlu0 %v1082, 64
    %v1085 = vpop.permute.xlu0 %1084
    %v1087 = vmul.f32 %v1069, %v1085
    %v1088 = vadd.f32 %v1061, %v56
    %v1089 = vxor.u32 %v1088, 2147483648
    %v1090 = vmul.f32 %v1089, 1.442695
    %v1091 = vpow.pop %v1090
    %v1092 = vadd.f32 %v1091, 1.0
    %v1093 = vrcp.pop %v1092
    %v1094 = vmul.f32 1.0, %v1093
    %v1095 = vtanh.pop %v1088
    %v1096 = vmul.f32 %v1094, %v973
    %1098 = vrot.lane.b32.xlu0 %v1095, 64
    %v1099 = vpop.permute.xlu0 %1098
    %v1101 = vmul.f32 %v1094, %v1099
    %1103 = vrot.lane.b32.xlu0 %v1101, 32
    %v1104 = vpop.permute.xlu0 %1103
    %v1106 = vadd.f32 %v1096, %v1104
    %v1107 = vtanh.pop %v1106
    %1109 = vrot.lane.b32.xlu0 %v1107, 64
    %v1110 = vpop.permute.xlu0 %1109
    %v1112 = vmul.f32 %v1094, %v1110
    %1114 = vrot.lane.b32.xlu0 %v1087, 32
    %v1115 = vpop.permute.xlu0 %1114
    %1118 = vrot.lane.b32.xlu0 %v1112, 64
    %v1119 = vpop.permute.xlu0 %1118
    %v1121 = vsel %vm210, %v1115, %v1119
    %v1123 = vsel %vm212, %v1121, 0
    %1125 = vmatprep.subr.mxu0 %v40
    %1126 = vmatpush1.msra.mxu0 %v39
    %1127 = vmatprep.subr.mxu0 %v42
    %1128 = vmatpush1.msra.mxu0 %v41
    %1129 = vmatprep.subr.mxu0 %v44
    %1130 = vmatpush1.msra.mxu0 %v43
    %1131 = vmatprep.subr.mxu0 %v46
    %1132 = vmatpush1.msra.mxu0 %v45
    %1133 = vmatprep.subr.mxu0 %v48
    %1134 = vmatpush1.msra.mxu0 %v47
    %1135 = vmatprep.subr.mxu0 %v50
    %1136 = vmatpush1.msra.mxu0 %v49
    %1137 = vmatprep.subr.mxu0 %v52
    %1138 = vmatpush1.msra.mxu0 %v51
    %1139 = vmatprep.subr.mxu0 %v54
    %1140 = vmatpush1.msra.mxu0 %v53
    %1141 = vmatprep.subr.mxu0 0.0
    %1142 = vmatpush1.msra.mxu0 0.0
    %1143 = vmatprep.subr.mxu0 0.0
    %1144 = vmatpush1.msra.mxu0 0.0
    %1145 = vmatprep.subr.mxu0 0.0
    %1146 = vmatpush1.msra.mxu0 0.0
    %1147 = vmatprep.subr.mxu0 0.0
    %1148 = vmatpush1.msra.mxu0 0.0
    %1149 = vmatprep.subr.mxu0 0.0
    %1150 = vmatpush1.msra.mxu0 0.0
    %1151 = vmatprep.subr.mxu0 0.0
    %1152 = vmatpush1.msra.mxu0 0.0
    %1153 = vmatprep.subr.mxu0 0.0
    %1154 = vmatpush1.msra.mxu0 0.0
    %1155 = vmatprep.subr.mxu0 0.0
    %1156 = vmatpush1.msra.mxu0 0.0
    %1157 = vmatprep.subr.mxu0 0.0
    %1158 = vmatpush1.msra.mxu0 0.0
    %1159 = vmatprep.subr.mxu0 0.0
    %1160 = vmatpush1.msra.mxu0 0.0
    %1161 = vmatprep.subr.mxu0 0.0
    %1162 = vmatpush1.msra.mxu0 0.0
    %1163 = vmatprep.subr.mxu0 0.0
    %1164 = vmatpush1.msra.mxu0 0.0
    %1165 = vmatprep.subr.mxu0 0.0
    %1166 = vmatpush1.msra.mxu0 0.0
    %1167 = vmatprep.subr.mxu0 0.0
    %1168 = vmatpush1.msra.mxu0 0.0
    %1169 = vmatprep.subr.mxu0 0.0
    %1170 = vmatpush1.msra.mxu0 0.0
    %1171 = vmatprep.subr.mxu0 0.0
    %1172 = vmatpush1.msra.mxu0 0.0
    %1173 = vmatprep.subr.mxu0 0.0
    %1174 = vmatpush1.msra.mxu0 0.0
    %1175 = vmatprep.subr.mxu0 0.0
    %1176 = vmatpush1.msra.mxu0 0.0
    %1177 = vmatprep.subr.mxu0 0.0
    %1178 = vmatpush1.msra.mxu0 0.0
    %1179 = vmatprep.subr.mxu0 0.0
    %1180 = vmatpush1.msra.mxu0 0.0
    %1181 = vmatprep.subr.mxu0 0.0
    %1182 = vmatpush1.msra.mxu0 0.0
    %1183 = vmatprep.subr.mxu0 0.0
    %1184 = vmatpush1.msra.mxu0 0.0
    %1185 = vmatprep.subr.mxu0 0.0
    %1186 = vmatpush1.msra.mxu0 0.0
    %1187 = vmatprep.subr.mxu0 0.0
    %1188 = vmatpush1.msra.mxu0 0.0
    %1189 = vmatprep.mubr.f32.mxu0 0.0
    %1190 = vmatmul.mubr.f32.gmra.mrb[0].mxu0 %v1123
    %v1191 = vpop.f32.mrb[0].mxu0
    %v1192 = vadd.f32 0.0, %v1191
    %v1193 = vpop.f32.mrb[0].mxu0
    %v1194 = vadd.f32 0.0, %v1193
    %1195 = vdwg.mxu0
    %v1196 = vadd.f32 %v192, %v1192
    %v1197 = vxor.u32 %v1196, 2147483648
    %v1198 = vmul.f32 %v1197, 1.442695
    %v1199 = vpow.pop %v1198
    %v1200 = vadd.f32 %v1199, 1.0
    %v1201 = vrcp.pop %v1200
    %v1202 = vmul.f32 1.0, %v1201
    %v1203 = vtanh.pop %v1196
    %v1204 = vmul.f32 %v1202, %v1081
    %1206 = vrot.lane.b32.xlu0 %v1203, 64
    %v1207 = vpop.permute.xlu0 %1206
    %v1209 = vmul.f32 %v1202, %v1207
    %1211 = vrot.lane.b32.xlu0 %v1209, 32
    %v1212 = vpop.permute.xlu0 %1211
    %v1214 = vadd.f32 %v1204, %v1212
    %v1215 = vtanh.pop %v1214
    %1217 = vrot.lane.b32.xlu0 %v1215, 64
    %v1218 = vpop.permute.xlu0 %1217
    %v1220 = vmul.f32 %v1202, %v1218
    %v1221 = vadd.f32 %v1194, %v56
    %v1222 = vxor.u32 %v1221, 2147483648
    %v1223 = vmul.f32 %v1222, 1.442695
    %v1224 = vpow.pop %v1223
    %v1225 = vadd.f32 %v1224, 1.0
    %v1226 = vrcp.pop %v1225
    %v1227 = vmul.f32 1.0, %v1226
    %v1228 = vtanh.pop %v1221
    %v1229 = vmul.f32 %v1227, %v1106
    %1231 = vrot.lane.b32.xlu0 %v1228, 64
    %v1232 = vpop.permute.xlu0 %1231
    %v1234 = vmul.f32 %v1227, %v1232
    %1236 = vrot.lane.b32.xlu0 %v1234, 32
    %v1237 = vpop.permute.xlu0 %1236
    %v1239 = vadd.f32 %v1229, %v1237
    %v1240 = vtanh.pop %v1239
    %1242 = vrot.lane.b32.xlu0 %v1240, 64
    %v1243 = vpop.permute.xlu0 %1242
    %v1245 = vmul.f32 %v1227, %v1243
    %1247 = vrot.lane.b32.xlu0 %v1220, 32
    %v1248 = vpop.permute.xlu0 %1247
    %1251 = vrot.lane.b32.xlu0 %v1245, 64
    %v1252 = vpop.permute.xlu0 %1251
    %v1254 = vsel %vm210, %v1248, %v1252
    %v1256 = vsel %vm212, %v1254, 0
    %1258 = vmatprep.subr.mxu0 %v40
    %1259 = vmatpush1.msra.mxu0 %v39
    %1260 = vmatprep.subr.mxu0 %v42
    %1261 = vmatpush1.msra.mxu0 %v41
    %1262 = vmatprep.subr.mxu0 %v44
    %1263 = vmatpush1.msra.mxu0 %v43
    %1264 = vmatprep.subr.mxu0 %v46
    %1265 = vmatpush1.msra.mxu0 %v45
    %1266 = vmatprep.subr.mxu0 %v48
    %1267 = vmatpush1.msra.mxu0 %v47
    %1268 = vmatprep.subr.mxu0 %v50
    %1269 = vmatpush1.msra.mxu0 %v49
    %1270 = vmatprep.subr.mxu0 %v52
    %1271 = vmatpush1.msra.mxu0 %v51
    %1272 = vmatprep.subr.mxu0 %v54
    %1273 = vmatpush1.msra.mxu0 %v53
    %1274 = vmatprep.subr.mxu0 0.0
    %1275 = vmatpush1.msra.mxu0 0.0
    %1276 = vmatprep.subr.mxu0 0.0
    %1277 = vmatpush1.msra.mxu0 0.0
    %1278 = vmatprep.subr.mxu0 0.0
    %1279 = vmatpush1.msra.mxu0 0.0
    %1280 = vmatprep.subr.mxu0 0.0
    %1281 = vmatpush1.msra.mxu0 0.0
    %1282 = vmatprep.subr.mxu0 0.0
    %1283 = vmatpush1.msra.mxu0 0.0
    %1284 = vmatprep.subr.mxu0 0.0
    %1285 = vmatpush1.msra.mxu0 0.0
    %1286 = vmatprep.subr.mxu0 0.0
    %1287 = vmatpush1.msra.mxu0 0.0
    %1288 = vmatprep.subr.mxu0 0.0
    %1289 = vmatpush1.msra.mxu0 0.0
    %1290 = vmatprep.subr.mxu0 0.0
    %1291 = vmatpush1.msra.mxu0 0.0
    %1292 = vmatprep.subr.mxu0 0.0
    %1293 = vmatpush1.msra.mxu0 0.0
    %1294 = vmatprep.subr.mxu0 0.0
    %1295 = vmatpush1.msra.mxu0 0.0
    %1296 = vmatprep.subr.mxu0 0.0
    %1297 = vmatpush1.msra.mxu0 0.0
    %1298 = vmatprep.subr.mxu0 0.0
    %1299 = vmatpush1.msra.mxu0 0.0
    %1300 = vmatprep.subr.mxu0 0.0
    %1301 = vmatpush1.msra.mxu0 0.0
    %1302 = vmatprep.subr.mxu0 0.0
    %1303 = vmatpush1.msra.mxu0 0.0
    %1304 = vmatprep.subr.mxu0 0.0
    %1305 = vmatpush1.msra.mxu0 0.0
    %1306 = vmatprep.subr.mxu0 0.0
    %1307 = vmatpush1.msra.mxu0 0.0
    %1308 = vmatprep.subr.mxu0 0.0
    %1309 = vmatpush1.msra.mxu0 0.0
    %1310 = vmatprep.subr.mxu0 0.0
    %1311 = vmatpush1.msra.mxu0 0.0
    %1312 = vmatprep.subr.mxu0 0.0
    %1313 = vmatpush1.msra.mxu0 0.0
    %1314 = vmatprep.subr.mxu0 0.0
    %1315 = vmatpush1.msra.mxu0 0.0
    %1316 = vmatprep.subr.mxu0 0.0
    %1317 = vmatpush1.msra.mxu0 0.0
    %1318 = vmatprep.subr.mxu0 0.0
    %1319 = vmatpush1.msra.mxu0 0.0
    %1320 = vmatprep.subr.mxu0 0.0
    %1321 = vmatpush1.msra.mxu0 0.0
    %1322 = vmatprep.mubr.f32.mxu0 0.0
    %1323 = vmatmul.mubr.f32.gmra.mrb[0].mxu0 %v1256
    %v1324 = vpop.f32.mrb[0].mxu0
    %v1325 = vpop.f32.mrb[0].mxu0
    %v1326 = vadd.f32 0.0, %v1325
    %1327 = vdwg.mxu0
    %v1328 = vadd.f32 %v1326, %v56
    %v1329 = vxor.u32 %v1328, 2147483648
    %v1330 = vmul.f32 %v1329, 1.442695
    %v1331 = vpow.pop %v1330
    %v1332 = vadd.f32 %v1331, 1.0
    %v1333 = vrcp.pop %v1332
    %v1334 = vmul.f32 1.0, %v1333
    %v1335 = vtanh.pop %v1328
    %v1336 = vmul.f32 %v1334, %v1239
    %1338 = vrot.lane.b32.xlu0 %v1335, 64
    %v1339 = vpop.permute.xlu0 %1338
    %v1341 = vmul.f32 %v1334, %v1339
    %1343 = vrot.lane.b32.xlu0 %v1341, 32
    %v1344 = vpop.permute.xlu0 %1343
    %v1346 = vadd.f32 %v1336, %v1344
    %v1347 = vtanh.pop %v1346
    %1349 = vrot.lane.b32.xlu0 %v1347, 64
    %v1350 = vpop.permute.xlu0 %1349
    %v1352 = vmul.f32 %v1334, %v1350
    %vm1353 = vcmask 257024
    %1354 = vst.msk [vmem:[#allocation5] sm:$0xf] %vm1353, %v1248
    %1356 = vrot.lane.b32.xlu0 %v1214, 96
    %v1357 = vpop.permute.xlu0 %1356
    %1359 = vst.msk [vmem:[#allocation6] sm:$0xf] %vm1353, %v1357
    %1361 = vrot.lane.b32.xlu0 %v1352, 32
    %v1362 = vpop.permute.xlu0 %1361
    %s1364 = scalar_lea.vmem [#allocation5], 4
    %1365 = vst.msk [vmem:[%s1364] sm:$0xf] %vm1353, %v1362
    %1367 = vrot.lane.b32.xlu0 %v1346, 96
    %v1368 = vpop.permute.xlu0 %1367
    %s1370 = scalar_lea.vmem [#allocation6], 4
    %1371 = vst.msk [vmem:[%s1370] sm:$0xf] %vm1353, %v1368
    %1373 = vrot.lane.b32.xlu0 %v55, 96
    %v1374 = vpop.permute.xlu0 %1373
    %v1376 = vmul.f32 %v1352, %v1374
    %1378 = vrot.lane.b32.xlu0 %v1376, 32
    %v1379 = vpop.permute.xlu0 %1378
    %v1381 = vsel %vm210, %v1379, 0.0
    %1382 = vadd.xlane.f32.xlu0 %v1381
    %v1383 = vpop.xlane.xlu0 %1382
    %v1384 = vadd.f32 %v1383, %v55
    %1386 = vrot.lane.b32.xlu0 %v1384, 96
    %v1387 = vpop.permute.xlu0 %1386
    %vm1389 = vcmask 3072
    %1390 = vst.msk [vmem:[%s4] sm:$0xf] %vm1389, %v1387
    // Predicated region
    $region22: #{forward.1} parent=1 // pred_check
      _
    $region23: #{forward.1} parent=1 // pred_check_branch
      %1392 = sbr.rel (0) target = $region25
    $region24: #{forward.1} parent=1 // pred_region
      _
    $region25: #{forward.1} parent=1 // pred_fallthru
      _
    // Predicated region
    $region26: #{forward.1} parent=1 // pred_check
      _
    $region27: #{forward.1} parent=1 // pred_check_branch
      %1394 = sbr.rel (0) target = $region29
    $region28: #{forward.1} parent=1 // pred_region
      %s1396 = ssub.s32 128, 128
      %1397 = vsyncadd [#allocation4], %s1396
      %s1398 = sshll.u32 [#allocation5], 4
      %s1399 = int_to_ptr.vmem [resolvable:$true] %s1398
      %1404 = dma.vmem_to_hbm [thread:$0]  %s1399, 128, %s5, [#allocation4], 64, 64, 4
    $region29: #{forward.1} parent=1 // pred_fallthru
      _
    // Predicated region
    $region30: #{forward.1} parent=1 // pred_check
      _
    $region31: #{forward.1} parent=1 // pred_check_branch
      %1406 = sbr.rel (0) target = $region33
    $region32: #{forward.1} parent=1 // pred_region
      %s1408 = ssub.s32 128, 128
      %1409 = vsyncadd [#allocation7], %s1408
      %s1410 = sshll.u32 [#allocation6], 4
      %s1411 = int_to_ptr.vmem [resolvable:$true] %s1410
      %1416 = dma.vmem_to_hbm [thread:$0]  %s1411, 128, %s6, [#allocation7], 64, 64, 4
    $region33: #{forward.1} parent=1 // pred_fallthru
      _
    // Predicated region
    $region34: #{forward.1} parent=1 // pred_check
      _
    $region35: #{forward.1} parent=1 // pred_check_branch
      %1418 = sbr.rel (0) target = $region37
    $region36: #{forward.1} parent=1 // pred_region
      _
    $region37: #{forward.1} parent=1 // pred_fallthru
      _
    // Predicated region
    $region38: #{forward.1} parent=1 // pred_check
      _
    $region39: #{forward.1} parent=1 // pred_check_branch
      %1420 = sbr.rel (0) target = $region41
    $region40: #{forward.1} parent=1 // pred_region
      %1421 = dma.done [#allocation4], 128
    $region41: #{forward.1} parent=1 // pred_fallthru
      _
    // Predicated region
    $region42: #{forward.1} parent=1 // pred_check
      _
    $region43: #{forward.1} parent=1 // pred_check_branch
      %1423 = sbr.rel (0) target = $region45
    $region44: #{forward.1} parent=1 // pred_region
      %1424 = dma.done [#allocation7], 128
    $region45: #{forward.1} parent=1 // pred_fallthru
      _
    %1425 = vsyncpa [#allocation3], 1
    %1426 = vsyncpa [#allocation4], 1
    %1427 = vsyncpa [#allocation7], 1

</llo_original>
